<compile_context>
chip_gen: v6e
topology: v6e:2x2x1
jax: 0.10.0
libtpu: 0.0.40
codegen_flags: <defaults>
</compile_context>

<pallas_src>
import numpy as np
import jax
import jax.numpy as jnp
from jax.experimental import pallas as pl
from jax.experimental.pallas import tpu as pltpu

_K = 5     # conv kernel size
_C1 = 4    # conv1 out channels
_C2 = 12   # conv2 out channels


# ----------------------------------------------------------------------------
# Fused forward-pass kernel
# ----------------------------------------------------------------------------
def _cnn_kernel(x_ref, band1_ref, b1_ref, band2_ref, b2_ref,
                csel_ref, rsel1_ref, rsel2_ref,
                wbig_ref, fb1_ref, fw2_ref, fb2_ref, fw3_ref, fb3_ref,
                o_ref):
    f32 = jnp.float32
    RB = x_ref.shape[0]          # 28 * B, rows interleaved as r*B + b
    B = RB // 28
    K = _K
    H1 = 24                      # conv1 output spatial (28 - 5 + 1)
    H2 = 8                       # conv2 output spatial (12 - 5 + 1)

    x = x_ref[...]                                                   # (28B, 28)

    # ---- conv1 + ReLU as one GEMM: cols of y1 are co*24 + w_out -----------
    # Tap i is one contiguous sublane slice; taps stacked along lanes so the
    # tap/row contraction happens inside a single (48,140)@(140,96) matmul.
    x5 = jnp.concatenate([x[i * B:(i + H1) * B, :] for i in range(K)],
                         axis=-1)                                    # (24B, 140)
    y1 = jnp.dot(x5, band1_ref[...], preferred_element_type=f32) + b1_ref[...]
    y1 = jnp.maximum(y1, 0.0)                                        # (24B, 96)

    # ---- maxpool 2x2 -> (12B, 48): pairwise max + 0/1 selection matmuls ----
    cm = jnp.maximum(y1[:, :-1], y1[:, 1:])                          # (24B, 95)
    rm = jnp.maximum(cm[:-B, :], cm[B:, :])                          # (24B-B, 95)
    z1 = jnp.dot(rsel1_ref[...],
                 jnp.dot(rm, csel_ref[...], preferred_element_type=f32),
                 preferred_element_type=f32)                         # (12B, 48)

    # ---- conv2 + ReLU as one GEMM: cols of y2 are co*8 + w_out -------------
    z5 = jnp.concatenate([z1[i * B:(i + H2) * B, :] for i in range(K)],
                         axis=-1)                                    # (8B, 240)
    y2 = jnp.dot(z5, band2_ref[...], preferred_element_type=f32) + b2_ref[...]
    y2 = jnp.maximum(y2, 0.0)                                        # (8B, 96)

    # ---- maxpool 2x2 -> (4B, 48) -------------------------------------------
    cm2 = jnp.maximum(y2[:, :-1], y2[:, 1:])                         # (8B, 95)
    rm2 = jnp.maximum(cm2[:-B, :], cm2[B:, :])                       # (8B-B, 95)
    p2 = jnp.dot(rsel2_ref[...],
                 jnp.dot(rm2, csel_ref[...], preferred_element_type=f32),
                 preferred_element_type=f32)                         # (4B, 48)

    # ---- fc1 with the torch flatten permutation folded into wbig -----------
    #   wbig[c, h*256 + o] = fc1_w[o, co*16 + h*4 + w]   (c = co*4 + w)
    #   h1[b, o] = sum_h t[h*B + b, h*256 + o]
    t = jnp.dot(p2, wbig_ref[...], preferred_element_type=f32)       # (4B, 1024)
    h1 = fb1_ref[...]
    for h in range(4):
        h1 = h1 + t[h * B:(h + 1) * B, h * 256:(h + 1) * 256]
    h1 = jnp.maximum(h1, 0.0)                                        # (B, 256)

    # ---- fc2 -> ReLU -> fc3 (zero-padded to lane multiples) ----------------
    h2 = jnp.maximum(
        jnp.dot(h1, fw2_ref[...], preferred_element_type=f32) + fb2_ref[...], 0.0)
    out = jnp.dot(h2, fw3_ref[...], preferred_element_type=f32) + fb3_ref[...]
    o_ref[...] = out.astype(o_ref.dtype)                             # (B, 128)


# ----------------------------------------------------------------------------
# Wrapper
# ----------------------------------------------------------------------------
@jax.jit
def cnn_forward(x, kp):
    """x: (B, 1, 28, 28) f32, kp: prepared params. Returns (B, 10) logits."""
    B = x.shape[0]
    # Interleave rows as r*B + b so every conv tap is one contiguous slice.
    xp = x.reshape(B, 28, 28).transpose(1, 0, 2).reshape(28 * B, 28)
    args = (xp, kp["band1"], kp["b1"], kp["band2"], kp["b2"],
            kp["csel"], kp["rsel1"], kp["rsel2"],
            kp["wbig"], kp["fb1"], kp["fw2"], kp["fb2"], kp["fw3"], kp["fb3"])
    vmem = pl.BlockSpec(memory_space=pltpu.MemorySpace.VMEM)
    padded = pl.pallas_call(
        _cnn_kernel,
        out_shape=jax.ShapeDtypeStruct((B, 128), jnp.float32),
        in_specs=[vmem] * len(args),
        out_specs=vmem,
        compiler_params=pltpu.CompilerParams(vmem_limit_bytes=32 * 1024 * 1024),
    )(*args)
    return padded[:, :10]


# ----------------------------------------------------------------------------
# One-time offline parameter preparation (layout plumbing, NOT in forward)
# ----------------------------------------------------------------------------
def _band(w, win):
    """Banded conv weights stacked tap-major: (K*Cin*Win, Cout*Wout).

    band[i*Cin*Win + ci*Win + w_in, co*Wout + w_out] = w[co, ci, i, w_in - w_out]
    so that (patches stacked along lanes) @ band == valid cross-correlation.
    """
    cout, cin, k, _ = w.shape
    wout = win - k + 1
    band = np.zeros((k, cin * win, cout * wout), np.float32)
    for i in range(k):
        for ci in range(cin):
            for co in range(cout):
                for wo in range(wout):
                    for j in range(k):
                        band[i, ci * win + wo + j, co * wout + wo] = w[co, ci, i, j]
    return band.reshape(k * cin * win, cout * wout)


def _col_sel(nc):
    """Pick even columns of the (nc-1)-wide pairwise-max: (nc-1, nc//2) 0/1."""
    p = np.arange(nc - 1)[:, None]
    c = np.arange(nc // 2)[None, :]
    return (p == 2 * c).astype(np.float32)


def _row_sel(nr, b):
    """Pick pooled rows for the interleaved h*B+b layout: (nr//2, nr-B) 0/1."""
    out = nr // 2
    sel = np.zeros((out, nr - b), np.float32)
    for q in range(out):
        r, bb = q // b, q % b
        sel[q, 2 * r * b + bb] = 1.0
    return sel


def prepare_params(params, batch):
    """Offline relayout: banded conv weights, pool selection matrices,
    flatten permutation folded into fc1, FC weights zero-padded to lane
    multiples, FC weights pre-transposed to (in, out)."""
    c1w = np.asarray(params["conv1_w"], np.float32)    # (4, 1, 5, 5)
    c2w = np.asarray(params["conv2_w"], np.float32)    # (12, 4, 5, 5)

    # fc1: feature f = co*16 + h*4 + w; wbig[c, h*256 + o] with c = co*4 + w
    f1 = np.asarray(params["fc1_w"], np.float32).reshape(250, _C2, 4, 4)
    wf = np.zeros((4, 48, 256), np.float32)
    wf[:, :, :250] = np.transpose(f1, (2, 1, 3, 0)).reshape(4, 48, 250)
    wbig = np.transpose(wf, (1, 0, 2)).reshape(48, 4 * 256)

    fw2 = np.zeros((256, 128), np.float32)
    fw2[:250, :100] = np.asarray(params["fc2_w"], np.float32).T
    fw3 = np.zeros((128, 128), np.float32)
    fw3[:100, :10] = np.asarray(params["fc3_w"], np.float32).T

    fb1 = np.zeros((1, 256), np.float32); fb1[0, :250] = np.asarray(params["fc1_b"])
    fb2 = np.zeros((1, 128), np.float32); fb2[0, :100] = np.asarray(params["fc2_b"])
    fb3 = np.zeros((1, 128), np.float32); fb3[0, :10] = np.asarray(params["fc3_b"])

    kp = {
        "band1": _band(c1w, 28),                                     # (140, 96)
        "b1": np.repeat(np.asarray(params["conv1_b"], np.float32), 24)[None, :],
        "band2": _band(c2w, 12),                                     # (240, 96)
        "b2": np.repeat(np.asarray(params["conv2_b"], np.float32), 8)[None, :],
        "csel": _col_sel(96),                                        # (95, 48)
        "rsel1": _row_sel(24 * batch, batch),                        # (12B, 24B-B)
        "rsel2": _row_sel(8 * batch, batch),                         # (4B, 8B-B)
        "wbig": wbig,                                                # (48, 1024)
        "fb1": fb1, "fw2": fw2, "fb2": fb2, "fw3": fw3, "fb3": fb3,
    }
    return {k: jnp.asarray(v) for k, v in kp.items()}


def init_params(key):
    """PyTorch-layout parameters (same shapes as the nn.Module)."""
    ks = jax.random.split(key, 10)
    f32 = jnp.float32

    def rnd(k, shape, scale):
        return jax.random.normal(k, shape, dtype=f32) * scale

    return {
        "conv1_w": rnd(ks[0], (_C1, 1, _K, _K), 0.1),
        "conv1_b": rnd(ks[1], (_C1,), 0.1),
        "conv2_w": rnd(ks[2], (_C2, _C1, _K, _K), 0.1),
        "conv2_b": rnd(ks[3], (_C2,), 0.1),
        "fc1_w": rnd(ks[4], (250, 192), 0.05),
        "fc1_b": rnd(ks[5], (250,), 0.05),
        "fc2_w": rnd(ks[6], (100, 250), 0.05),
        "fc2_b": rnd(ks[7], (100,), 0.05),
        "fc3_w": rnd(ks[8], (10, 100), 0.05),
        "fc3_b": rnd(ks[9], (10,), 0.05),
    }


def _reference(x, params):
    """Pure-JAX reference matching the PyTorch module."""
    dn = ("NCHW", "OIHW", "NCHW")
    y = jax.lax.conv_general_dilated(x, params["conv1_w"], (1, 1), "VALID",
                                     dimension_numbers=dn)
    y = jax.nn.relu(y + params["conv1_b"][None, :, None, None])
    y = jax.lax.reduce_window(y, -jnp.inf, jax.lax.max,
                              (1, 1, 2, 2), (1, 1, 2, 2), "VALID")
    y = jax.lax.conv_general_dilated(y, params["conv2_w"], (1, 1), "VALID",
                                     dimension_numbers=dn)
    y = jax.nn.relu(y + params["conv2_b"][None, :, None, None])
    y = jax.lax.reduce_window(y, -jnp.inf, jax.lax.max,
                              (1, 1, 2, 2), (1, 1, 2, 2), "VALID")
    y = y.reshape(y.shape[0], -1)
    y = jax.nn.relu(y @ params["fc1_w"].T + params["fc1_b"])
    y = jax.nn.relu(y @ params["fc2_w"].T + params["fc2_b"])
    return y @ params["fc3_w"].T + params["fc3_b"]


if __name__ == "__main__":
    key = jax.random.PRNGKey(0)
    k_params, k_x = jax.random.split(key)
    params = init_params(k_params)

    # Spatial size 28x28 is fixed by the module (flatten -> 192 = 12*4*4).
    B = 2
    x = jax.random.normal(k_x, (B, 1, 28, 28), dtype=jnp.float32)
    kparams = prepare_params(params, batch=B)   # one-time offline layout prep

    out = cnn_forward(x, kparams)
    jax.block_until_ready(out)
    assert out.shape == (B, 10)

    ref = _reference(x, params)
    err = float(jnp.max(jnp.abs(out - ref)))
    assert err < 1e-3, f"max abs err vs reference: {err}"

    print("KERNEL_OK")
</pallas_src>

<mosaic_0001>
module attributes {stable_mosaic.version = 11 : i64} {
  func.func @_cnn_kernel(%arg0: memref<56x28xf32, #tpu.memory_space<vmem>>, %arg1: memref<140x96xf32, #tpu.memory_space<vmem>>, %arg2: memref<1x96xf32, #tpu.memory_space<vmem>>, %arg3: memref<240x96xf32, #tpu.memory_space<vmem>>, %arg4: memref<1x96xf32, #tpu.memory_space<vmem>>, %arg5: memref<95x48xf32, #tpu.memory_space<vmem>>, %arg6: memref<24x46xf32, #tpu.memory_space<vmem>>, %arg7: memref<8x14xf32, #tpu.memory_space<vmem>>, %arg8: memref<48x1024xf32, #tpu.memory_space<vmem>>, %arg9: memref<1x256xf32, #tpu.memory_space<vmem>>, %arg10: memref<256x128xf32, #tpu.memory_space<vmem>>, %arg11: memref<1x128xf32, #tpu.memory_space<vmem>>, %arg12: memref<128x128xf32, #tpu.memory_space<vmem>>, %arg13: memref<1x128xf32, #tpu.memory_space<vmem>>, %arg14: memref<2x128xf32, #tpu.memory_space<vmem>>) attributes {dimension_semantics = [], scalar_prefetch = 0 : i64, scratch_operands = 0 : i64, tpu.core_type = #tpu.core_type<tc>} {
    %c0 = arith.constant 0 : index
    %c0_0 = arith.constant 0 : index
    %0 = vector.load %arg0[%c0, %c0_0] : memref<56x28xf32, #tpu.memory_space<vmem>>, vector<56x28xf32>
    %1 = vector.extract_strided_slice %0 {offsets = [0, 0], sizes = [48, 28], strides = [1, 1]} : vector<56x28xf32> to vector<48x28xf32>
    %2 = vector.extract_strided_slice %0 {offsets = [2, 0], sizes = [48, 28], strides = [1, 1]} : vector<56x28xf32> to vector<48x28xf32>
    %3 = vector.extract_strided_slice %0 {offsets = [4, 0], sizes = [48, 28], strides = [1, 1]} : vector<56x28xf32> to vector<48x28xf32>
    %4 = vector.extract_strided_slice %0 {offsets = [6, 0], sizes = [48, 28], strides = [1, 1]} : vector<56x28xf32> to vector<48x28xf32>
    %5 = vector.extract_strided_slice %0 {offsets = [8, 0], sizes = [48, 28], strides = [1, 1]} : vector<56x28xf32> to vector<48x28xf32>
    %6 = tpu.concatenate %1, %2, %3, %4, %5 in 1 : vector<48x28xf32>, vector<48x28xf32>, vector<48x28xf32>, vector<48x28xf32>, vector<48x28xf32> -> vector<48x140xf32>
    %c0_1 = arith.constant 0 : index
    %c0_2 = arith.constant 0 : index
    %7 = vector.load %arg1[%c0_1, %c0_2] : memref<140x96xf32, #tpu.memory_space<vmem>>, vector<140x96xf32>
    %cst = arith.constant dense<0.000000e+00> : vector<48x96xf32>
    %8 = tpu.matmul %6, %7, %cst {dimension_numbers = #tpu.dot_dimension_numbers<[1], [0], [0], [1], [0, 0, 1, 1], [], []>} : vector<48x140xf32>, vector<140x96xf32>, vector<48x96xf32> -> vector<48x96xf32>
    %c0_3 = arith.constant 0 : index
    %c0_4 = arith.constant 0 : index
    %9 = vector.load %arg2[%c0_3, %c0_4] : memref<1x96xf32, #tpu.memory_space<vmem>>, vector<1x96xf32>
    %10 = vector.broadcast %9 : vector<1x96xf32> to vector<48x96xf32>
    %11 = arith.addf %8, %10 : vector<48x96xf32>
    %cst_5 = arith.constant 0.000000e+00 : f32
    %12 = vector.broadcast %cst_5 : f32 to vector<48x96xf32>
    %13 = arith.maximumf %11, %12 : vector<48x96xf32>
    %14 = vector.extract_strided_slice %13 {offsets = [0, 0], sizes = [48, 95], strides = [1, 1]} : vector<48x96xf32> to vector<48x95xf32>
    %15 = vector.extract_strided_slice %13 {offsets = [0, 1], sizes = [48, 95], strides = [1, 1]} : vector<48x96xf32> to vector<48x95xf32>
    %16 = arith.maximumf %14, %15 : vector<48x95xf32>
    %17 = vector.extract_strided_slice %16 {offsets = [0, 0], sizes = [46, 95], strides = [1, 1]} : vector<48x95xf32> to vector<46x95xf32>
    %18 = vector.extract_strided_slice %16 {offsets = [2, 0], sizes = [46, 95], strides = [1, 1]} : vector<48x95xf32> to vector<46x95xf32>
    %19 = arith.maximumf %17, %18 : vector<46x95xf32>
    %c0_6 = arith.constant 0 : index
    %c0_7 = arith.constant 0 : index
    %20 = vector.load %arg6[%c0_6, %c0_7] : memref<24x46xf32, #tpu.memory_space<vmem>>, vector<24x46xf32>
    %c0_8 = arith.constant 0 : index
    %c0_9 = arith.constant 0 : index
    %21 = vector.load %arg5[%c0_8, %c0_9] : memref<95x48xf32, #tpu.memory_space<vmem>>, vector<95x48xf32>
    %cst_10 = arith.constant dense<0.000000e+00> : vector<46x48xf32>
    %22 = tpu.matmul %19, %21, %cst_10 {dimension_numbers = #tpu.dot_dimension_numbers<[1], [0], [0], [1], [0, 0, 1, 1], [], []>} : vector<46x95xf32>, vector<95x48xf32>, vector<46x48xf32> -> vector<46x48xf32>
    %cst_11 = arith.constant dense<0.000000e+00> : vector<24x48xf32>
    %23 = tpu.matmul %20, %22, %cst_11 {dimension_numbers = #tpu.dot_dimension_numbers<[1], [0], [0], [1], [0, 0, 1, 1], [], []>} : vector<24x46xf32>, vector<46x48xf32>, vector<24x48xf32> -> vector<24x48xf32>
    %24 = vector.extract_strided_slice %23 {offsets = [0, 0], sizes = [16, 48], strides = [1, 1]} : vector<24x48xf32> to vector<16x48xf32>
    %25 = vector.extract_strided_slice %23 {offsets = [2, 0], sizes = [16, 48], strides = [1, 1]} : vector<24x48xf32> to vector<16x48xf32>
    %26 = vector.extract_strided_slice %23 {offsets = [4, 0], sizes = [16, 48], strides = [1, 1]} : vector<24x48xf32> to vector<16x48xf32>
    %27 = vector.extract_strided_slice %23 {offsets = [6, 0], sizes = [16, 48], strides = [1, 1]} : vector<24x48xf32> to vector<16x48xf32>
    %28 = vector.extract_strided_slice %23 {offsets = [8, 0], sizes = [16, 48], strides = [1, 1]} : vector<24x48xf32> to vector<16x48xf32>
    %29 = tpu.concatenate %24, %25, %26, %27, %28 in 1 : vector<16x48xf32>, vector<16x48xf32>, vector<16x48xf32>, vector<16x48xf32>, vector<16x48xf32> -> vector<16x240xf32>
    %c0_12 = arith.constant 0 : index
    %c0_13 = arith.constant 0 : index
    %30 = vector.load %arg3[%c0_12, %c0_13] : memref<240x96xf32, #tpu.memory_space<vmem>>, vector<240x96xf32>
    %cst_14 = arith.constant dense<0.000000e+00> : vector<16x96xf32>
    %31 = tpu.matmul %29, %30, %cst_14 {dimension_numbers = #tpu.dot_dimension_numbers<[1], [0], [0], [1], [0, 0, 1, 1], [], []>} : vector<16x240xf32>, vector<240x96xf32>, vector<16x96xf32> -> vector<16x96xf32>
    %c0_15 = arith.constant 0 : index
    %c0_16 = arith.constant 0 : index
    %32 = vector.load %arg4[%c0_15, %c0_16] : memref<1x96xf32, #tpu.memory_space<vmem>>, vector<1x96xf32>
    %33 = vector.broadcast %32 : vector<1x96xf32> to vector<16x96xf32>
    %34 = arith.addf %31, %33 : vector<16x96xf32>
    %cst_17 = arith.constant 0.000000e+00 : f32
    %35 = vector.broadcast %cst_17 : f32 to vector<16x96xf32>
    %36 = arith.maximumf %34, %35 : vector<16x96xf32>
    %37 = vector.extract_strided_slice %36 {offsets = [0, 0], sizes = [16, 95], strides = [1, 1]} : vector<16x96xf32> to vector<16x95xf32>
    %38 = vector.extract_strided_slice %36 {offsets = [0, 1], sizes = [16, 95], strides = [1, 1]} : vector<16x96xf32> to vector<16x95xf32>
    %39 = arith.maximumf %37, %38 : vector<16x95xf32>
    %40 = vector.extract_strided_slice %39 {offsets = [0, 0], sizes = [14, 95], strides = [1, 1]} : vector<16x95xf32> to vector<14x95xf32>
    %41 = vector.extract_strided_slice %39 {offsets = [2, 0], sizes = [14, 95], strides = [1, 1]} : vector<16x95xf32> to vector<14x95xf32>
    %42 = arith.maximumf %40, %41 : vector<14x95xf32>
    %c0_18 = arith.constant 0 : index
    %c0_19 = arith.constant 0 : index
    %43 = vector.load %arg7[%c0_18, %c0_19] : memref<8x14xf32, #tpu.memory_space<vmem>>, vector<8x14xf32>
    %c0_20 = arith.constant 0 : index
    %c0_21 = arith.constant 0 : index
    %44 = vector.load %arg5[%c0_20, %c0_21] : memref<95x48xf32, #tpu.memory_space<vmem>>, vector<95x48xf32>
    %cst_22 = arith.constant dense<0.000000e+00> : vector<14x48xf32>
    %45 = tpu.matmul %42, %44, %cst_22 {dimension_numbers = #tpu.dot_dimension_numbers<[1], [0], [0], [1], [0, 0, 1, 1], [], []>} : vector<14x95xf32>, vector<95x48xf32>, vector<14x48xf32> -> vector<14x48xf32>
    %cst_23 = arith.constant dense<0.000000e+00> : vector<8x48xf32>
    %46 = tpu.matmul %43, %45, %cst_23 {dimension_numbers = #tpu.dot_dimension_numbers<[1], [0], [0], [1], [0, 0, 1, 1], [], []>} : vector<8x14xf32>, vector<14x48xf32>, vector<8x48xf32> -> vector<8x48xf32>
    %c0_24 = arith.constant 0 : index
    %c0_25 = arith.constant 0 : index
    %47 = vector.load %arg8[%c0_24, %c0_25] : memref<48x1024xf32, #tpu.memory_space<vmem>>, vector<48x1024xf32>
    %cst_26 = arith.constant dense<0.000000e+00> : vector<8x1024xf32>
    %48 = tpu.matmul %46, %47, %cst_26 {dimension_numbers = #tpu.dot_dimension_numbers<[1], [0], [0], [1], [0, 0, 1, 1], [], []>} : vector<8x48xf32>, vector<48x1024xf32>, vector<8x1024xf32> -> vector<8x1024xf32>
    %c0_27 = arith.constant 0 : index
    %c0_28 = arith.constant 0 : index
    %49 = vector.load %arg9[%c0_27, %c0_28] : memref<1x256xf32, #tpu.memory_space<vmem>>, vector<1x256xf32>
    %50 = vector.extract_strided_slice %48 {offsets = [0, 0], sizes = [2, 256], strides = [1, 1]} : vector<8x1024xf32> to vector<2x256xf32>
    %51 = vector.broadcast %49 : vector<1x256xf32> to vector<2x256xf32>
    %52 = arith.addf %51, %50 : vector<2x256xf32>
    %53 = vector.extract_strided_slice %48 {offsets = [2, 256], sizes = [2, 256], strides = [1, 1]} : vector<8x1024xf32> to vector<2x256xf32>
    %54 = arith.addf %52, %53 : vector<2x256xf32>
    %55 = vector.extract_strided_slice %48 {offsets = [4, 512], sizes = [2, 256], strides = [1, 1]} : vector<8x1024xf32> to vector<2x256xf32>
    %56 = arith.addf %54, %55 : vector<2x256xf32>
    %57 = vector.extract_strided_slice %48 {offsets = [6, 768], sizes = [2, 256], strides = [1, 1]} : vector<8x1024xf32> to vector<2x256xf32>
    %58 = arith.addf %56, %57 : vector<2x256xf32>
    %cst_29 = arith.constant 0.000000e+00 : f32
    %59 = vector.broadcast %cst_29 : f32 to vector<2x256xf32>
    %60 = arith.maximumf %58, %59 : vector<2x256xf32>
    %c0_30 = arith.constant 0 : index
    %c0_31 = arith.constant 0 : index
    %61 = vector.load %arg10[%c0_30, %c0_31] : memref<256x128xf32, #tpu.memory_space<vmem>>, vector<256x128xf32>
    %cst_32 = arith.constant dense<0.000000e+00> : vector<2x128xf32>
    %62 = tpu.matmul %60, %61, %cst_32 {dimension_numbers = #tpu.dot_dimension_numbers<[1], [0], [0], [1], [0, 0, 1, 1], [], []>} : vector<2x256xf32>, vector<256x128xf32>, vector<2x128xf32> -> vector<2x128xf32>
    %c0_33 = arith.constant 0 : index
    %c0_34 = arith.constant 0 : index
    %63 = vector.load %arg11[%c0_33, %c0_34] : memref<1x128xf32, #tpu.memory_space<vmem>>, vector<1x128xf32>
    %64 = vector.broadcast %63 : vector<1x128xf32> to vector<2x128xf32>
    %65 = arith.addf %62, %64 : vector<2x128xf32>
    %cst_35 = arith.constant 0.000000e+00 : f32
    %66 = vector.broadcast %cst_35 : f32 to vector<2x128xf32>
    %67 = arith.maximumf %65, %66 : vector<2x128xf32>
    %c0_36 = arith.constant 0 : index
    %c0_37 = arith.constant 0 : index
    %68 = vector.load %arg12[%c0_36, %c0_37] : memref<128x128xf32, #tpu.memory_space<vmem>>, vector<128x128xf32>
    %cst_38 = arith.constant dense<0.000000e+00> : vector<2x128xf32>
    %69 = tpu.matmul %67, %68, %cst_38 {dimension_numbers = #tpu.dot_dimension_numbers<[1], [0], [0], [1], [0, 0, 1, 1], [], []>} : vector<2x128xf32>, vector<128x128xf32>, vector<2x128xf32> -> vector<2x128xf32>
    %c0_39 = arith.constant 0 : index
    %c0_40 = arith.constant 0 : index
    %70 = vector.load %arg13[%c0_39, %c0_40] : memref<1x128xf32, #tpu.memory_space<vmem>>, vector<1x128xf32>
    %71 = vector.broadcast %70 : vector<1x128xf32> to vector<2x128xf32>
    %72 = arith.addf %69, %71 : vector<2x128xf32>
    %c0_41 = arith.constant 0 : index
    %c0_42 = arith.constant 0 : index
    %73 = vector.load %arg14[%c0_41, %c0_42] : memref<2x128xf32, #tpu.memory_space<vmem>>, vector<2x128xf32>
    tpu.vector_store %arg14[%c0_41, %c0_42], %72 {strides = array<i32>} : memref<2x128xf32, #tpu.memory_space<vmem>>, vector<2x128xf32>,
    return
  }
}

</mosaic_0001>

<llo_original>
// kernel: cnn_forward.1
$region0: #{cnn_forward.1}
  #allocation0 [shape = 'u32[]', space=smem, size = 0x4, offset = 0x4, fixed_abs, tag = 'smem constant byte address 0x4 - core index']
  #allocation1 [shape = 'u32[144,128]{1,0:T(1,128)}', space=vmem, size = 0x12000, scoped, tag = 'internal scratch']
  %s0 = inlined_call_operand.vmem [shape: f32[56,28], index: 0, kind: input, shape index: {}]
  %s1 = inlined_call_operand.hbm [shape: f32[140,96], index: 1, kind: input, shape index: {}]
  %s2 = inlined_call_operand.vmem [shape: f32[1,96], index: 2, kind: input, shape index: {}]
  %s3 = inlined_call_operand.vmem [shape: f32[240,96], index: 3, kind: input, shape index: {}]
  %s4 = inlined_call_operand.vmem [shape: f32[1,96], index: 4, kind: input, shape index: {}]
  %s5 = inlined_call_operand.vmem [shape: f32[95,48], index: 5, kind: input, shape index: {}]
  %s6 = inlined_call_operand.vmem [shape: f32[24,46], index: 6, kind: input, shape index: {}]
  %s7 = inlined_call_operand.vmem [shape: f32[8,14], index: 7, kind: input, shape index: {}]
  %s8 = inlined_call_operand.vmem [shape: f32[48,1024], index: 8, kind: input, shape index: {}]
  %s9 = inlined_call_operand.vmem [shape: f32[1,256], index: 9, kind: input, shape index: {}]
  %s10 = inlined_call_operand.vmem [shape: f32[256,128], index: 10, kind: input, shape index: {}]
  %s11 = inlined_call_operand.vmem [shape: f32[1,128], index: 11, kind: input, shape index: {}]
  %s12 = inlined_call_operand.hbm [shape: f32[128,128], index: 12, kind: input, shape index: {}]
  %s13 = inlined_call_operand.vmem [shape: f32[1,128], index: 13, kind: input, shape index: {}]
  %s14 = inlined_call_operand.hbm [shape: f32[2,128], index: 14, kind: output, shape index: {}]
  %s15 = sld [smem:[#allocation0]]
  $region74: #{cnn_forward.1} parent=0
    _
  %s17 = ssub.s32 1, %s15
  %s18 = scalar_select 0, %s17, %s15
  $region1: #{cnn_forward.1} parent=0
    #allocation2 [shape = 'u8[73728]{0}', space=vmem, size = 0x12000, scoped, tag = 'input window, operand 1, single buffered']
    #allocation3 [shape = 's32[1]{0}', space=sflag, size = 0x4, scoped, tag = 'scoped memory for cnn_forward.1']
    #allocation4 [shape = 's32[1]{0}', space=sflag, size = 0x4, scoped, tag = 'scoped memory for cnn_forward.1']
    #allocation5 [shape = 'u8[65536]{0}', space=vmem, size = 0x10000, scoped, tag = 'input window, operand 12, single buffered']
    #allocation6 [shape = 's32[1]{0}', space=sflag, size = 0x4, scoped, tag = 'scoped memory for cnn_forward.1']
    #allocation7 [shape = 'u8[1024]{0}', space=vmem, size = 0x400, scoped, tag = 'output window, operand 0, single buffered']
    %19 = vsyncpa [#allocation3], 0
    %20 = vsyncpa [#allocation6], 0
    %21 = vsyncpa [#allocation4], 0
    // Predicated region
    $region2: #{cnn_forward.1} parent=1 // pred_check
      _
    $region3: #{cnn_forward.1} parent=1 // pred_check_branch
      %23 = sbr.rel (0) target = $region5
    $region4: #{cnn_forward.1} parent=1 // pred_region
      _
    $region5: #{cnn_forward.1} parent=1 // pred_fallthru
      _
    // Predicated region
    $region6: #{cnn_forward.1} parent=1 // pred_check
      _
    $region7: #{cnn_forward.1} parent=1 // pred_check_branch
      %25 = sbr.rel (0) target = $region9
    $region8: #{cnn_forward.1} parent=1 // pred_region
      %s27 = ssub.s32 2304, 2304
      %28 = vsyncadd [#allocation3], %s27
      %s29 = sshll.u32 [#allocation2], 4
      %s30 = int_to_ptr.vmem [resolvable:$true] %s29
      %35 = dma.hbm_to_vmem [thread:$0]  %s1, 2304, %s30, [#allocation3], 128, 128, 8
    $region9: #{cnn_forward.1} parent=1 // pred_fallthru
      _
    // Predicated region
    $region10: #{cnn_forward.1} parent=1 // pred_check
      _
    $region11: #{cnn_forward.1} parent=1 // pred_check_branch
      %37 = sbr.rel (0) target = $region13
    $region12: #{cnn_forward.1} parent=1 // pred_region
      _
    $region13: #{cnn_forward.1} parent=1 // pred_fallthru
      _
    // Predicated region
    $region14: #{cnn_forward.1} parent=1 // pred_check
      _
    $region15: #{cnn_forward.1} parent=1 // pred_check_branch
      %39 = sbr.rel (0) target = $region17
    $region16: #{cnn_forward.1} parent=1 // pred_region
      _
    $region17: #{cnn_forward.1} parent=1 // pred_fallthru
      _
    // Predicated region
    $region18: #{cnn_forward.1} parent=1 // pred_check
      _
    $region19: #{cnn_forward.1} parent=1 // pred_check_branch
      %41 = sbr.rel (0) target = $region21
    $region20: #{cnn_forward.1} parent=1 // pred_region
      _
    $region21: #{cnn_forward.1} parent=1 // pred_fallthru
      _
    // Predicated region
    $region22: #{cnn_forward.1} parent=1 // pred_check
      _
    $region23: #{cnn_forward.1} parent=1 // pred_check_branch
      %43 = sbr.rel (0) target = $region25
    $region24: #{cnn_forward.1} parent=1 // pred_region
      _
    $region25: #{cnn_forward.1} parent=1 // pred_fallthru
      _
    // Predicated region
    $region26: #{cnn_forward.1} parent=1 // pred_check
      _
    $region27: #{cnn_forward.1} parent=1 // pred_check_branch
      %45 = sbr.rel (0) target = $region29
    $region28: #{cnn_forward.1} parent=1 // pred_region
      _
    $region29: #{cnn_forward.1} parent=1 // pred_fallthru
      _
    // Predicated region
    $region30: #{cnn_forward.1} parent=1 // pred_check
      _
    $region31: #{cnn_forward.1} parent=1 // pred_check_branch
      %47 = sbr.rel (0) target = $region33
    $region32: #{cnn_forward.1} parent=1 // pred_region
      _
    $region33: #{cnn_forward.1} parent=1 // pred_fallthru
      _
    // Predicated region
    $region34: #{cnn_forward.1} parent=1 // pred_check
      _
    $region35: #{cnn_forward.1} parent=1 // pred_check_branch
      %49 = sbr.rel (0) target = $region37
    $region36: #{cnn_forward.1} parent=1 // pred_region
      _
    $region37: #{cnn_forward.1} parent=1 // pred_fallthru
      _
    // Predicated region
    $region38: #{cnn_forward.1} parent=1 // pred_check
      _
    $region39: #{cnn_forward.1} parent=1 // pred_check_branch
      %51 = sbr.rel (0) target = $region41
    $region40: #{cnn_forward.1} parent=1 // pred_region
      _
    $region41: #{cnn_forward.1} parent=1 // pred_fallthru
      _
    // Predicated region
    $region42: #{cnn_forward.1} parent=1 // pred_check
      _
    $region43: #{cnn_forward.1} parent=1 // pred_check_branch
      %53 = sbr.rel (0) target = $region45
    $region44: #{cnn_forward.1} parent=1 // pred_region
      _
    $region45: #{cnn_forward.1} parent=1 // pred_fallthru
      _
    // Predicated region
    $region46: #{cnn_forward.1} parent=1 // pred_check
      _
    $region47: #{cnn_forward.1} parent=1 // pred_check_branch
      %55 = sbr.rel (0) target = $region49
    $region48: #{cnn_forward.1} parent=1 // pred_region
      _
    $region49: #{cnn_forward.1} parent=1 // pred_fallthru
      _
    // Predicated region
    $region50: #{cnn_forward.1} parent=1 // pred_check
      _
    $region51: #{cnn_forward.1} parent=1 // pred_check_branch
      %57 = sbr.rel (0) target = $region53
    $region52: #{cnn_forward.1} parent=1 // pred_region
      %s59 = ssub.s32 2048, 2048
      %60 = vsyncadd [#allocation6], %s59
      %s61 = sshll.u32 [#allocation5], 4
      %s62 = int_to_ptr.vmem [resolvable:$true] %s61
      %67 = dma.hbm_to_vmem [thread:$0]  %s12, 2048, %s62, [#allocation6], 128, 128, 8
    $region53: #{cnn_forward.1} parent=1 // pred_fallthru
      _
    // Predicated region
    $region54: #{cnn_forward.1} parent=1 // pred_check
      _
    $region55: #{cnn_forward.1} parent=1 // pred_check_branch
      %69 = sbr.rel (0) target = $region57
    $region56: #{cnn_forward.1} parent=1 // pred_region
      _
    $region57: #{cnn_forward.1} parent=1 // pred_fallthru
      _
    // Predicated region
    $region58: #{cnn_forward.1} parent=1 // pred_check
      _
    $region59: #{cnn_forward.1} parent=1 // pred_check_branch
      %71 = sbr.rel (0) target = $region61
    $region60: #{cnn_forward.1} parent=1 // pred_region
      %72 = dma.done [#allocation3], 2304
    $region61: #{cnn_forward.1} parent=1 // pred_fallthru
      _
    // Predicated region
    $region62: #{cnn_forward.1} parent=1 // pred_check
      _
    $region63: #{cnn_forward.1} parent=1 // pred_check_branch
      %74 = sbr.rel (0) target = $region65
    $region64: #{cnn_forward.1} parent=1 // pred_region
      %75 = dma.done [#allocation6], 2048
    $region65: #{cnn_forward.1} parent=1 // pred_fallthru
      _
    %v76 = vld [vmem:[%s0] sm:$0xff]
    %v77 = vld [vmem:[%s0 + $0x8] sm:$0xff]
    %v78 = vld [vmem:[%s0 + $0x10] sm:$0xff]
    %v79 = vld [vmem:[%s0 + $0x18] sm:$0xff]
    %v80 = vld [vmem:[%s0 + $0x20] sm:$0xff]
    %v81 = vld [vmem:[%s0 + $0x28] sm:$0xff]
    %v82 = vld [vmem:[%s0 + $0x30] sm:$0xff]
    %vm90 = vcmask 1045504
    %v91 = vrot.slane %v76, 2
    %v92 = vrot.slane %v77, 2
    %v93 = vsel %vm90, %v91, %v92
    %v94 = vrot.slane %v78, 2
    %v95 = vsel %vm90, %v92, %v94
    %v96 = vrot.slane %v79, 2
    %v97 = vsel %vm90, %v94, %v96
    %v98 = vrot.slane %v80, 2
    %v99 = vsel %vm90, %v96, %v98
    %v100 = vrot.slane %v81, 2
    %v101 = vsel %vm90, %v98, %v100
    %v102 = vrot.slane %v82, 2
    %v103 = vsel %vm90, %v100, %v102
    %104 = vrot.lane.b32.xlu0 %v93, 28
    %v105 = vpop.permute.xlu0 %104
    %106 = vrot.lane.b32.xlu0 %v95, 28
    %v107 = vpop.permute.xlu0 %106
    %108 = vrot.lane.b32.xlu0 %v97, 28
    %v109 = vpop.permute.xlu0 %108
    %110 = vrot.lane.b32.xlu0 %v99, 28
    %v111 = vpop.permute.xlu0 %110
    %112 = vrot.lane.b32.xlu0 %v101, 28
    %v113 = vpop.permute.xlu0 %112
    %114 = vrot.lane.b32.xlu0 %v103, 28
    %v115 = vpop.permute.xlu0 %114
    %vm122 = vcmask 1043456
    %v123 = vrot.slane %v76, 4
    %v124 = vrot.slane %v77, 4
    %v125 = vsel %vm122, %v123, %v124
    %v126 = vrot.slane %v78, 4
    %v127 = vsel %vm122, %v124, %v126
    %v128 = vrot.slane %v79, 4
    %v129 = vsel %vm122, %v126, %v128
    %v130 = vrot.slane %v80, 4
    %v131 = vsel %vm122, %v128, %v130
    %v132 = vrot.slane %v81, 4
    %v133 = vsel %vm122, %v130, %v132
    %v134 = vrot.slane %v82, 4
    %v135 = vsel %vm122, %v132, %v134
    %136 = vrot.lane.b32.xlu0 %v125, 56
    %v137 = vpop.permute.xlu0 %136
    %138 = vrot.lane.b32.xlu0 %v127, 56
    %v139 = vpop.permute.xlu0 %138
    %140 = vrot.lane.b32.xlu0 %v129, 56
    %v141 = vpop.permute.xlu0 %140
    %142 = vrot.lane.b32.xlu0 %v131, 56
    %v143 = vpop.permute.xlu0 %142
    %144 = vrot.lane.b32.xlu0 %v133, 56
    %v145 = vpop.permute.xlu0 %144
    %146 = vrot.lane.b32.xlu0 %v135, 56
    %v147 = vpop.permute.xlu0 %146
    %vm154 = vcmask 1041408
    %v155 = vrot.slane %v76, 6
    %v156 = vrot.slane %v77, 6
    %v157 = vsel %vm154, %v155, %v156
    %v158 = vrot.slane %v78, 6
    %v159 = vsel %vm154, %v156, %v158
    %v160 = vrot.slane %v79, 6
    %v161 = vsel %vm154, %v158, %v160
    %v162 = vrot.slane %v80, 6
    %v163 = vsel %vm154, %v160, %v162
    %v164 = vrot.slane %v81, 6
    %v165 = vsel %vm154, %v162, %v164
    %v166 = vrot.slane %v82, 6
    %v167 = vsel %vm154, %v164, %v166
    %168 = vrot.lane.b32.xlu0 %v157, 84
    %v169 = vpop.permute.xlu0 %168
    %170 = vrot.lane.b32.xlu0 %v159, 84
    %v171 = vpop.permute.xlu0 %170
    %172 = vrot.lane.b32.xlu0 %v161, 84
    %v173 = vpop.permute.xlu0 %172
    %174 = vrot.lane.b32.xlu0 %v163, 84
    %v175 = vpop.permute.xlu0 %174
    %176 = vrot.lane.b32.xlu0 %v165, 84
    %v177 = vpop.permute.xlu0 %176
    %178 = vrot.lane.b32.xlu0 %v167, 84
    %v179 = vpop.permute.xlu0 %178
    %186 = vrot.lane.b32.xlu0 %v77, 112
    %v187 = vpop.permute.xlu0 %186
    %188 = vrot.lane.b32.xlu0 %v78, 112
    %v189 = vpop.permute.xlu0 %188
    %190 = vrot.lane.b32.xlu0 %v79, 112
    %v191 = vpop.permute.xlu0 %190
    %192 = vrot.lane.b32.xlu0 %v80, 112
    %v193 = vpop.permute.xlu0 %192
    %194 = vrot.lane.b32.xlu0 %v81, 112
    %v195 = vpop.permute.xlu0 %194
    %196 = vrot.lane.b32.xlu0 %v82, 112
    %v197 = vpop.permute.xlu0 %196
    %vm204 = vcmask 228352
    %v205 = vsel %vm204, %v76, %v105
    %v206 = vsel %vm204, %v77, %v107
    %v207 = vsel %vm204, %v78, %v109
    %v208 = vsel %vm204, %v79, %v111
    %v209 = vsel %vm204, %v80, %v113
    %v210 = vsel %vm204, %v81, %v115
    %vm211 = vcmask 457728
    %v212 = vsel %vm211, %v205, %v137
    %v213 = vsel %vm211, %v206, %v139
    %v214 = vsel %vm211, %v207, %v141
    %v215 = vsel %vm211, %v208, %v143
    %v216 = vsel %vm211, %v209, %v145
    %v217 = vsel %vm211, %v210, %v147
    %vm218 = vcmask 687104
    %v219 = vsel %vm218, %v212, %v169
    %v220 = vsel %vm218, %v213, %v171
    %v221 = vsel %vm218, %v214, %v173
    %v222 = vsel %vm218, %v215, %v175
    %v223 = vsel %vm218, %v216, %v177
    %v224 = vsel %vm218, %v217, %v179
    %vm225 = vcmask 916480
    %v226 = vsel %vm225, %v219, %v187
    %v227 = vsel %vm225, %v220, %v189
    %v228 = vsel %vm225, %v221, %v191
    %v229 = vsel %vm225, %v222, %v193
    %v230 = vsel %vm225, %v223, %v195
    %v231 = vsel %vm225, %v224, %v197
    %v232 = vld [vmem:[#allocation2] sm:$0xff]
    %v233 = vld [vmem:[#allocation2 + $0x8] sm:$0xff]
    %v234 = vld [vmem:[#allocation2 + $0x10] sm:$0xff]
    %v235 = vld [vmem:[#allocation2 + $0x18] sm:$0xff]
    %v236 = vld [vmem:[#allocation2 + $0x20] sm:$0xff]
    %v237 = vld [vmem:[#allocation2 + $0x28] sm:$0xff]
    %v238 = vld [vmem:[#allocation2 + $0x30] sm:$0xff]
    %v239 = vld [vmem:[#allocation2 + $0x38] sm:$0xff]
    %v240 = vld [vmem:[#allocation2 + $0x40] sm:$0xff]
    %v241 = vld [vmem:[#allocation2 + $0x48] sm:$0xff]
    %v242 = vld [vmem:[#allocation2 + $0x50] sm:$0xff]
    %v243 = vld [vmem:[#allocation2 + $0x58] sm:$0xff]
    %v244 = vld [vmem:[#allocation2 + $0x60] sm:$0xff]
    %v245 = vld [vmem:[#allocation2 + $0x68] sm:$0xff]
    %v246 = vld [vmem:[#allocation2 + $0x70] sm:$0xff]
    %v247 = vld [vmem:[#allocation2 + $0x78] sm:$0xff]
    %v248 = vld [vmem:[#allocation2 + $0x80] sm:$0xff]
    %v249 = vld [vmem:[#allocation2 + $0x88] sm:$0xf]
    %v250 = vld [vmem:[%s2] sm:$0x1]
    %v252 = vlaneseq
    %v253 = vshrl.u32 %v252, 7
    %v254 = vsub.s32 0, %v253
    %v255 = vrot.slane %v250, %v254
    %vm257 = vcmask 97280
    %v258 = vsel %vm257, %v187, 0
    %v260 = vsel %vm257, %v189, 0
    %v262 = vsel %vm257, %v191, 0
    %v264 = vsel %vm257, %v193, 0
    %v266 = vsel %vm257, %v195, 0
    %v268 = vsel %vm257, %v197, 0
    %v271 = vsel %vm122, %v249, 0
    %273 = vmatprep.subr.mxu0 0.0
    %274 = vmatpush1.msra.mxu0 %v247
    %275 = vmatprep.subr.mxu0 0.0
    %276 = vmatpush1.msra.mxu0 %v246
    %277 = vmatprep.subr.mxu0 0.0
    %278 = vmatpush1.msra.mxu0 %v245
    %279 = vmatprep.subr.mxu0 0.0
    %280 = vmatpush1.msra.mxu0 %v244
    %281 = vmatprep.subr.mxu0 0.0
    %282 = vmatpush1.msra.mxu0 %v243
    %283 = vmatprep.subr.mxu0 0.0
    %284 = vmatpush1.msra.mxu0 %v242
    %285 = vmatprep.subr.mxu0 0.0
    %286 = vmatpush1.msra.mxu0 %v241
    %287 = vmatprep.subr.mxu0 0.0
    %288 = vmatpush1.msra.mxu0 %v240
    %289 = vmatprep.subr.mxu0 0.0
    %290 = vmatpush1.msra.mxu0 %v239
    %291 = vmatprep.subr.mxu0 0.0
    %292 = vmatpush1.msra.mxu0 %v238
    %293 = vmatprep.subr.mxu0 0.0
    %294 = vmatpush1.msra.mxu0 %v237
    %295 = vmatprep.subr.mxu0 0.0
    %296 = vmatpush1.msra.mxu0 %v236
    %297 = vmatprep.subr.mxu0 0.0
    %298 = vmatpush1.msra.mxu0 %v235
    %299 = vmatprep.subr.mxu0 0.0
    %300 = vmatpush1.msra.mxu0 %v234
    %301 = vmatprep.subr.mxu0 0.0
    %302 = vmatpush1.msra.mxu0 %v233
    %303 = vmatprep.subr.mxu0 0.0
    %304 = vmatpush1.msra.mxu0 %v232
    %305 = vmatprep.subr.mxu0 0.0
    %306 = vmatpush2.msra.mxu0 0.0
    %307 = vmatprep.subr.mxu0 0.0
    %308 = vmatpush2.msra.mxu0 0.0
    %309 = vmatprep.subr.mxu0 0.0
    %310 = vmatpush2.msra.mxu0 0.0
    %311 = vmatprep.subr.mxu0 0.0
    %312 = vmatpush2.msra.mxu0 0.0
    %313 = vmatprep.subr.mxu0 0.0
    %314 = vmatpush2.msra.mxu0 0.0
    %315 = vmatprep.subr.mxu0 0.0
    %316 = vmatpush2.msra.mxu0 0.0
    %317 = vmatprep.subr.mxu0 0.0
    %318 = vmatpush2.msra.mxu0 0.0
    %319 = vmatprep.subr.mxu0 0.0
    %320 = vmatpush2.msra.mxu0 0.0
    %321 = vmatprep.subr.mxu0 0.0
    %322 = vmatpush2.msra.mxu0 0.0
    %323 = vmatprep.subr.mxu0 0.0
    %324 = vmatpush2.msra.mxu0 0.0
    %325 = vmatprep.subr.mxu0 0.0
    %326 = vmatpush2.msra.mxu0 0.0
    %327 = vmatprep.subr.mxu0 0.0
    %328 = vmatpush2.msra.mxu0 0.0
    %329 = vmatprep.subr.mxu0 0.0
    %330 = vmatpush2.msra.mxu0 0.0
    %331 = vmatprep.subr.mxu0 0.0
    %332 = vmatpush2.msra.mxu0 0.0
    %333 = vmatprep.subr.mxu0 0.0
    %334 = vmatpush2.msra.mxu0 %v271
    %335 = vmatprep.subr.mxu0 0.0
    %336 = vmatpush2.msra.mxu0 %v248
    %337 = vmatprep.mubr.f32.mxu0 %v258
    %338 = vmatmul.mubr.f32.gmra.mxu0 %v226
    %v339 = vpop.f32.mrf.mxu0
    %v340 = vadd.f32 %v255, %v339
    %v341 = vpop.f32.mrf.mxu0
    %342 = vmatprep.mubr.f32.mxu0 %v260
    %343 = vmatmul.mubr.f32.gmra.mxu0 %v227
    %v344 = vpop.f32.mrf.mxu0
    %v345 = vadd.f32 %v255, %v344
    %v346 = vpop.f32.mrf.mxu0
    %347 = vmatprep.mubr.f32.mxu0 %v262
    %348 = vmatmul.mubr.f32.gmra.mxu0 %v228
    %v349 = vpop.f32.mrf.mxu0
    %v350 = vadd.f32 %v255, %v349
    %v351 = vpop.f32.mrf.mxu0
    %352 = vmatprep.mubr.f32.mxu0 %v264
    %353 = vmatmul.mubr.f32.gmra.mxu0 %v229
    %v354 = vpop.f32.mrf.mxu0
    %v355 = vadd.f32 %v255, %v354
    %v356 = vpop.f32.mrf.mxu0
    %357 = vmatprep.mubr.f32.mxu0 %v266
    %358 = vmatmul.mubr.f32.gmra.mxu0 %v230
    %v359 = vpop.f32.mrf.mxu0
    %v360 = vadd.f32 %v255, %v359
    %v361 = vpop.f32.mrf.mxu0
    %362 = vmatprep.mubr.f32.mxu0 %v268
    %363 = vmatmul.mubr.f32.gmra.mxu0 %v231
    %v364 = vpop.f32.mrf.mxu0
    %v365 = vadd.f32 %v255, %v364
    %v366 = vpop.f32.mrf.mxu0
    %367 = vdwg.mxu0
    %v368 = vmax.f32 %v340, 0.0
    %v369 = vmax.f32 %v345, 0.0
    %v370 = vmax.f32 %v350, 0.0
    %v371 = vmax.f32 %v355, 0.0
    %v372 = vmax.f32 %v360, 0.0
    %v373 = vmax.f32 %v365, 0.0
    %380 = vrot.lane.b32.xlu0 %v368, 127
    %v381 = vpop.permute.xlu0 %380
    %382 = vrot.lane.b32.xlu0 %v369, 127
    %v383 = vpop.permute.xlu0 %382
    %384 = vrot.lane.b32.xlu0 %v370, 127
    %v385 = vpop.permute.xlu0 %384
    %386 = vrot.lane.b32.xlu0 %v371, 127
    %v387 = vpop.permute.xlu0 %386
    %388 = vrot.lane.b32.xlu0 %v372, 127
    %v389 = vpop.permute.xlu0 %388
    %390 = vrot.lane.b32.xlu0 %v373, 127
    %v391 = vpop.permute.xlu0 %390
    %v398 = vmax.f32 %v368, %v381
    %v399 = vmax.f32 %v369, %v383
    %v400 = vmax.f32 %v370, %v385
    %v401 = vmax.f32 %v371, %v387
    %v402 = vmax.f32 %v372, %v389
    %v403 = vmax.f32 %v373, %v391
    %v410 = vrot.slane %v398, 2
    %v411 = vrot.slane %v399, 2
    %v412 = vsel %vm90, %v410, %v411
    %v413 = vrot.slane %v400, 2
    %v414 = vsel %vm90, %v411, %v413
    %v415 = vrot.slane %v401, 2
    %v416 = vsel %vm90, %v413, %v415
    %v417 = vrot.slane %v402, 2
    %v418 = vsel %vm90, %v415, %v417
    %v419 = vrot.slane %v403, 2
    %v420 = vsel %vm90, %v417, %v419
    %v427 = vmax.f32 %v398, %v412
    %v428 = vmax.f32 %v399, %v414
    %v429 = vmax.f32 %v400, %v416
    %v430 = vmax.f32 %v401, %v418
    %v431 = vmax.f32 %v402, %v420
    %v432 = vmax.f32 %v403, %v419
    %v433 = vld [vmem:[%s6] sm:$0xff]
    %v434 = vld [vmem:[%s6 + $0x8] sm:$0xff]
    %v435 = vld [vmem:[%s6 + $0x10] sm:$0xff]
    %v436 = vld [vmem:[%s5] sm:$0xff]
    %v437 = vld [vmem:[%s5 + $0x8] sm:$0xff]
    %v438 = vld [vmem:[%s5 + $0x10] sm:$0xff]
    %v439 = vld [vmem:[%s5 + $0x18] sm:$0xff]
    %v440 = vld [vmem:[%s5 + $0x20] sm:$0xff]
    %v441 = vld [vmem:[%s5 + $0x28] sm:$0xff]
    %v442 = vld [vmem:[%s5 + $0x30] sm:$0xff]
    %v443 = vld [vmem:[%s5 + $0x38] sm:$0xff]
    %v444 = vld [vmem:[%s5 + $0x40] sm:$0xff]
    %v445 = vld [vmem:[%s5 + $0x48] sm:$0xff]
    %v446 = vld [vmem:[%s5 + $0x50] sm:$0xff]
    %v447 = vld [vmem:[%s5 + $0x58] sm:$0x7f]
    %vm448 = vcmask 777216
    %v450 = vsel %vm448, %v427, 0
    %v453 = vsel %vm448, %v428, 0
    %v456 = vsel %vm448, %v429, 0
    %v459 = vsel %vm448, %v430, 0
    %v462 = vsel %vm448, %v431, 0
    %v465 = vsel %vm448, %v432, 0
    %vm467 = vcmask 1046528
    %v469 = vsel %vm467, %v447, 0
    %471 = vmatprep.subr.mxu0 0.0
    %472 = vmatpush1.msra.mxu0 0.0
    %473 = vmatprep.subr.mxu0 0.0
    %474 = vmatpush1.msra.mxu0 0.0
    %475 = vmatprep.subr.mxu0 0.0
    %476 = vmatpush1.msra.mxu0 0.0
    %477 = vmatprep.subr.mxu0 0.0
    %478 = vmatpush1.msra.mxu0 0.0
    %479 = vmatprep.subr.mxu0 0.0
    %480 = vmatpush1.msra.mxu0 %v469
    %481 = vmatprep.subr.mxu0 0.0
    %482 = vmatpush1.msra.mxu0 %v446
    %483 = vmatprep.subr.mxu0 0.0
    %484 = vmatpush1.msra.mxu0 %v445
    %485 = vmatprep.subr.mxu0 0.0
    %486 = vmatpush1.msra.mxu0 %v444
    %487 = vmatprep.subr.mxu0 0.0
    %488 = vmatpush1.msra.mxu0 %v443
    %489 = vmatprep.subr.mxu0 0.0
    %490 = vmatpush1.msra.mxu0 %v442
    %491 = vmatprep.subr.mxu0 0.0
    %492 = vmatpush1.msra.mxu0 %v441
    %493 = vmatprep.subr.mxu0 0.0
    %494 = vmatpush1.msra.mxu0 %v440
    %495 = vmatprep.subr.mxu0 0.0
    %496 = vmatpush1.msra.mxu0 %v439
    %497 = vmatprep.subr.mxu0 0.0
    %498 = vmatpush1.msra.mxu0 %v438
    %499 = vmatprep.subr.mxu0 0.0
    %500 = vmatpush1.msra.mxu0 %v437
    %501 = vmatprep.subr.mxu0 0.0
    %502 = vmatpush1.msra.mxu0 %v436
    %503 = vmatprep.subr.mxu0 0.0
    %504 = vmatpush2.msra.mxu0 0.0
    %505 = vmatprep.subr.mxu0 0.0
    %506 = vmatpush2.msra.mxu0 0.0
    %507 = vmatprep.subr.mxu0 0.0
    %508 = vmatpush2.msra.mxu0 0.0
    %509 = vmatprep.subr.mxu0 0.0
    %510 = vmatpush2.msra.mxu0 0.0
    %511 = vmatprep.subr.mxu0 0.0
    %512 = vmatpush2.msra.mxu0 0.0
    %513 = vmatprep.subr.mxu0 0.0
    %514 = vmatpush2.msra.mxu0 0.0
    %515 = vmatprep.subr.mxu0 0.0
    %516 = vmatpush2.msra.mxu0 0.0
    %517 = vmatprep.subr.mxu0 0.0
    %518 = vmatpush2.msra.mxu0 0.0
    %519 = vmatprep.subr.mxu0 0.0
    %520 = vmatpush2.msra.mxu0 0.0
    %521 = vmatprep.subr.mxu0 0.0
    %522 = vmatpush2.msra.mxu0 0.0
    %523 = vmatprep.subr.mxu0 0.0
    %524 = vmatpush2.msra.mxu0 0.0
    %525 = vmatprep.subr.mxu0 0.0
    %526 = vmatpush2.msra.mxu0 0.0
    %527 = vmatprep.subr.mxu0 0.0
    %528 = vmatpush2.msra.mxu0 0.0
    %529 = vmatprep.subr.mxu0 0.0
    %530 = vmatpush2.msra.mxu0 0.0
    %531 = vmatprep.subr.mxu0 0.0
    %532 = vmatpush2.msra.mxu0 0.0
    %533 = vmatprep.subr.mxu0 0.0
    %534 = vmatpush2.msra.mxu0 0.0
    %535 = vmatprep.mubr.f32.mxu0 0.0
    %536 = vmatmul.mubr.f32.gmra.mxu0 %v450
    %v537 = vpop.f32.mrf.mxu0
    %v538 = vadd.f32 0.0, %v537
    %v539 = vpop.f32.mrf.mxu0
    %540 = vmatprep.mubr.f32.mxu0 0.0
    %541 = vmatmul.mubr.f32.gmra.mxu0 %v453
    %v542 = vpop.f32.mrf.mxu0
    %v543 = vadd.f32 0.0, %v542
    %v544 = vpop.f32.mrf.mxu0
    %545 = vmatprep.mubr.f32.mxu0 0.0
    %546 = vmatmul.mubr.f32.gmra.mxu0 %v456
    %v547 = vpop.f32.mrf.mxu0
    %v548 = vadd.f32 0.0, %v547
    %v549 = vpop.f32.mrf.mxu0
    %550 = vmatprep.mubr.f32.mxu0 0.0
    %551 = vmatmul.mubr.f32.gmra.mxu0 %v459
    %v552 = vpop.f32.mrf.mxu0
    %v553 = vadd.f32 0.0, %v552
    %v554 = vpop.f32.mrf.mxu0
    %555 = vmatprep.mubr.f32.mxu0 0.0
    %556 = vmatmul.mubr.f32.gmra.mxu0 %v462
    %v557 = vpop.f32.mrf.mxu0
    %v558 = vadd.f32 0.0, %v557
    %v559 = vpop.f32.mrf.mxu0
    %560 = vmatprep.mubr.f32.mxu0 0.0
    %561 = vmatmul.mubr.f32.gmra.mxu0 %v465
    %v562 = vpop.f32.mrf.mxu0
    %v563 = vadd.f32 0.0, %v562
    %v564 = vpop.f32.mrf.mxu0
    %565 = vdwg.mxu0
    %vm566 = vcmask 375808
    %v568 = vsel %vm566, %v433, 0
    %v571 = vsel %vm566, %v434, 0
    %v574 = vsel %vm566, %v435, 0
    %v577 = vsel %vm90, %v563, 0
    %579 = vmatprep.subr.mxu0 0.0
    %580 = vmatpush1.msra.mxu0 0.0
    %581 = vmatprep.subr.mxu0 0.0
    %582 = vmatpush1.msra.mxu0 0.0
    %583 = vmatprep.subr.mxu0 0.0
    %584 = vmatpush1.msra.mxu0 0.0
    %585 = vmatprep.subr.mxu0 0.0
    %586 = vmatpush1.msra.mxu0 0.0
    %587 = vmatprep.subr.mxu0 0.0
    %588 = vmatpush1.msra.mxu0 0.0
    %589 = vmatprep.subr.mxu0 0.0
    %590 = vmatpush1.msra.mxu0 0.0
    %591 = vmatprep.subr.mxu0 0.0
    %592 = vmatpush1.msra.mxu0 0.0
    %593 = vmatprep.subr.mxu0 0.0
    %594 = vmatpush1.msra.mxu0 0.0
    %595 = vmatprep.subr.mxu0 0.0
    %596 = vmatpush1.msra.mxu0 0.0
    %597 = vmatprep.subr.mxu0 0.0
    %598 = vmatpush1.msra.mxu0 0.0
    %599 = vmatprep.subr.mxu0 0.0
    %600 = vmatpush1.msra.mxu0 %v577
    %601 = vmatprep.subr.mxu0 0.0
    %602 = vmatpush1.msra.mxu0 %v558
    %603 = vmatprep.subr.mxu0 0.0
    %604 = vmatpush1.msra.mxu0 %v553
    %605 = vmatprep.subr.mxu0 0.0
    %606 = vmatpush1.msra.mxu0 %v548
    %607 = vmatprep.subr.mxu0 0.0
    %608 = vmatpush1.msra.mxu0 %v543
    %609 = vmatprep.subr.mxu0 0.0
    %610 = vmatpush1.msra.mxu0 %v538
    %611 = vmatprep.subr.mxu0 0.0
    %612 = vmatpush2.msra.mxu0 0.0
    %613 = vmatprep.subr.mxu0 0.0
    %614 = vmatpush2.msra.mxu0 0.0
    %615 = vmatprep.subr.mxu0 0.0
    %616 = vmatpush2.msra.mxu0 0.0
    %617 = vmatprep.subr.mxu0 0.0
    %618 = vmatpush2.msra.mxu0 0.0
    %619 = vmatprep.subr.mxu0 0.0
    %620 = vmatpush2.msra.mxu0 0.0
    %621 = vmatprep.subr.mxu0 0.0
    %622 = vmatpush2.msra.mxu0 0.0
    %623 = vmatprep.subr.mxu0 0.0
    %624 = vmatpush2.msra.mxu0 0.0
    %625 = vmatprep.subr.mxu0 0.0
    %626 = vmatpush2.msra.mxu0 0.0
    %627 = vmatprep.subr.mxu0 0.0
    %628 = vmatpush2.msra.mxu0 0.0
    %629 = vmatprep.subr.mxu0 0.0
    %630 = vmatpush2.msra.mxu0 0.0
    %631 = vmatprep.subr.mxu0 0.0
    %632 = vmatpush2.msra.mxu0 0.0
    %633 = vmatprep.subr.mxu0 0.0
    %634 = vmatpush2.msra.mxu0 0.0
    %635 = vmatprep.subr.mxu0 0.0
    %636 = vmatpush2.msra.mxu0 0.0
    %637 = vmatprep.subr.mxu0 0.0
    %638 = vmatpush2.msra.mxu0 0.0
    %639 = vmatprep.subr.mxu0 0.0
    %640 = vmatpush2.msra.mxu0 0.0
    %641 = vmatprep.subr.mxu0 0.0
    %642 = vmatpush2.msra.mxu0 0.0
    %643 = vmatprep.mubr.f32.mxu0 0.0
    %644 = vmatmul.mubr.f32.gmra.mxu0 %v568
    %v645 = vpop.f32.mrf.mxu0
    %v646 = vadd.f32 0.0, %v645
    %v647 = vpop.f32.mrf.mxu0
    %648 = vmatprep.mubr.f32.mxu0 0.0
    %649 = vmatmul.mubr.f32.gmra.mxu0 %v571
    %v650 = vpop.f32.mrf.mxu0
    %v651 = vadd.f32 0.0, %v650
    %v652 = vpop.f32.mrf.mxu0
    %653 = vmatprep.mubr.f32.mxu0 0.0
    %654 = vmatmul.mubr.f32.gmra.mxu0 %v574
    %v655 = vpop.f32.mrf.mxu0
    %v656 = vadd.f32 0.0, %v655
    %v657 = vpop.f32.mrf.mxu0
    %658 = vdwg.mxu0
    %v662 = vrot.slane %v646, 2
    %v663 = vrot.slane %v651, 2
    %v664 = vsel %vm90, %v662, %v663
    %v665 = vrot.slane %v656, 2
    %v666 = vsel %vm90, %v663, %v665
    %667 = vrot.lane.b32.xlu0 %v664, 48
    %v668 = vpop.permute.xlu0 %667
    %669 = vrot.lane.b32.xlu0 %v666, 48
    %v670 = vpop.permute.xlu0 %669
    %v673 = vrot.slane %v646, 4
    %v674 = vrot.slane %v651, 4
    %v675 = vsel %vm122, %v673, %v674
    %v676 = vrot.slane %v656, 4
    %v677 = vsel %vm122, %v674, %v676
    %678 = vrot.lane.b32.xlu0 %v675, 96
    %v679 = vpop.permute.xlu0 %678
    %680 = vrot.lane.b32.xlu0 %v677, 96
    %v681 = vpop.permute.xlu0 %680
    %v684 = vrot.slane %v646, 6
    %v685 = vrot.slane %v651, 6
    %v686 = vsel %vm154, %v684, %v685
    %v687 = vrot.slane %v656, 6
    %v688 = vsel %vm154, %v685, %v687
    %689 = vrot.lane.b32.xlu0 %v686, 16
    %v690 = vpop.permute.xlu0 %689
    %691 = vrot.lane.b32.xlu0 %v688, 16
    %v692 = vpop.permute.xlu0 %691
    %695 = vrot.lane.b32.xlu0 %v651, 64
    %v696 = vpop.permute.xlu0 %695
    %697 = vrot.lane.b32.xlu0 %v656, 64
    %v698 = vpop.permute.xlu0 %697
    %vm701 = vcmask 392192
    %v702 = vsel %vm701, %v646, %v668
    %v703 = vsel %vm701, %v651, %v670
    %vm704 = vcmask 785408
    %v705 = vsel %vm704, %v702, %v679
    %v706 = vsel %vm704, %v703, %v681
    %vm707 = vcmask 130048
    %v708 = vsel %vm707, %v679, %v690
    %v709 = vsel %vm707, %v681, %v692
    %vm710 = vcmask 523264
    %v711 = vsel %vm710, %v708, %v696
    %v712 = vsel %vm710, %v709, %v698
    %v713 = vld [vmem:[%s3] sm:$0xff]
    %v714 = vld [vmem:[%s3 + $0x8] sm:$0xff]
    %v715 = vld [vmem:[%s3 + $0x10] sm:$0xff]
    %v716 = vld [vmem:[%s3 + $0x18] sm:$0xff]
    %v717 = vld [vmem:[%s3 + $0x20] sm:$0xff]
    %v718 = vld [vmem:[%s3 + $0x28] sm:$0xff]
    %v719 = vld [vmem:[%s3 + $0x30] sm:$0xff]
    %v720 = vld [vmem:[%s3 + $0x38] sm:$0xff]
    %v721 = vld [vmem:[%s3 + $0x40] sm:$0xff]
    %v722 = vld [vmem:[%s3 + $0x48] sm:$0xff]
    %v723 = vld [vmem:[%s3 + $0x50] sm:$0xff]
    %v724 = vld [vmem:[%s3 + $0x58] sm:$0xff]
    %v725 = vld [vmem:[%s3 + $0x60] sm:$0xff]
    %v726 = vld [vmem:[%s3 + $0x68] sm:$0xff]
    %v727 = vld [vmem:[%s3 + $0x70] sm:$0xff]
    %v728 = vld [vmem:[%s3 + $0x78] sm:$0xff]
    %v729 = vld [vmem:[%s3 + $0x80] sm:$0xff]
    %v730 = vld [vmem:[%s3 + $0x88] sm:$0xff]
    %v731 = vld [vmem:[%s3 + $0x90] sm:$0xff]
    %v732 = vld [vmem:[%s3 + $0x98] sm:$0xff]
    %v733 = vld [vmem:[%s3 + $0xa0] sm:$0xff]
    %v734 = vld [vmem:[%s3 + $0xa8] sm:$0xff]
    %v735 = vld [vmem:[%s3 + $0xb0] sm:$0xff]
    %v736 = vld [vmem:[%s3 + $0xb8] sm:$0xff]
    %v737 = vld [vmem:[%s3 + $0xc0] sm:$0xff]
    %v738 = vld [vmem:[%s3 + $0xc8] sm:$0xff]
    %v739 = vld [vmem:[%s3 + $0xd0] sm:$0xff]
    %v740 = vld [vmem:[%s3 + $0xd8] sm:$0xff]
    %v741 = vld [vmem:[%s3 + $0xe0] sm:$0xff]
    %v742 = vld [vmem:[%s3 + $0xe8] sm:$0xff]
    %v743 = vld [vmem:[%s4] sm:$0x1]
    %v745 = vlaneseq
    %v746 = vshrl.u32 %v745, 7
    %v747 = vsub.s32 0, %v746
    %v748 = vrot.slane %v743, %v747
    %v751 = vsel %vm225, %v711, 0
    %v754 = vsel %vm225, %v712, 0
    %756 = vmatprep.subr.mxu0 0.0
    %757 = vmatpush1.msra.mxu0 %v728
    %758 = vmatprep.subr.mxu0 0.0
    %759 = vmatpush1.msra.mxu0 %v727
    %760 = vmatprep.subr.mxu0 0.0
    %761 = vmatpush1.msra.mxu0 %v726
    %762 = vmatprep.subr.mxu0 0.0
    %763 = vmatpush1.msra.mxu0 %v725
    %764 = vmatprep.subr.mxu0 0.0
    %765 = vmatpush1.msra.mxu0 %v724
    %766 = vmatprep.subr.mxu0 0.0
    %767 = vmatpush1.msra.mxu0 %v723
    %768 = vmatprep.subr.mxu0 0.0
    %769 = vmatpush1.msra.mxu0 %v722
    %770 = vmatprep.subr.mxu0 0.0
    %771 = vmatpush1.msra.mxu0 %v721
    %772 = vmatprep.subr.mxu0 0.0
    %773 = vmatpush1.msra.mxu0 %v720
    %774 = vmatprep.subr.mxu0 0.0
    %775 = vmatpush1.msra.mxu0 %v719
    %776 = vmatprep.subr.mxu0 0.0
    %777 = vmatpush1.msra.mxu0 %v718
    %778 = vmatprep.subr.mxu0 0.0
    %779 = vmatpush1.msra.mxu0 %v717
    %780 = vmatprep.subr.mxu0 0.0
    %781 = vmatpush1.msra.mxu0 %v716
    %782 = vmatprep.subr.mxu0 0.0
    %783 = vmatpush1.msra.mxu0 %v715
    %784 = vmatprep.subr.mxu0 0.0
    %785 = vmatpush1.msra.mxu0 %v714
    %786 = vmatprep.subr.mxu0 0.0
    %787 = vmatpush1.msra.mxu0 %v713
    %788 = vmatprep.subr.mxu0 0.0
    %789 = vmatpush2.msra.mxu0 0.0
    %790 = vmatprep.subr.mxu0 0.0
    %791 = vmatpush2.msra.mxu0 0.0
    %792 = vmatprep.subr.mxu0 0.0
    %793 = vmatpush2.msra.mxu0 %v742
    %794 = vmatprep.subr.mxu0 0.0
    %795 = vmatpush2.msra.mxu0 %v741
    %796 = vmatprep.subr.mxu0 0.0
    %797 = vmatpush2.msra.mxu0 %v740
    %798 = vmatprep.subr.mxu0 0.0
    %799 = vmatpush2.msra.mxu0 %v739
    %800 = vmatprep.subr.mxu0 0.0
    %801 = vmatpush2.msra.mxu0 %v738
    %802 = vmatprep.subr.mxu0 0.0
    %803 = vmatpush2.msra.mxu0 %v737
    %804 = vmatprep.subr.mxu0 0.0
    %805 = vmatpush2.msra.mxu0 %v736
    %806 = vmatprep.subr.mxu0 0.0
    %807 = vmatpush2.msra.mxu0 %v735
    %808 = vmatprep.subr.mxu0 0.0
    %809 = vmatpush2.msra.mxu0 %v734
    %810 = vmatprep.subr.mxu0 0.0
    %811 = vmatpush2.msra.mxu0 %v733
    %812 = vmatprep.subr.mxu0 0.0
    %813 = vmatpush2.msra.mxu0 %v732
    %814 = vmatprep.subr.mxu0 0.0
    %815 = vmatpush2.msra.mxu0 %v731
    %816 = vmatprep.subr.mxu0 0.0
    %817 = vmatpush2.msra.mxu0 %v730
    %818 = vmatprep.subr.mxu0 0.0
    %819 = vmatpush2.msra.mxu0 %v729
    %820 = vmatprep.mubr.f32.mxu0 %v751
    %821 = vmatmul.mubr.f32.gmra.mxu0 %v705
    %v822 = vpop.f32.mrf.mxu0
    %v823 = vadd.f32 %v748, %v822
    %v824 = vpop.f32.mrf.mxu0
    %825 = vmatprep.mubr.f32.mxu0 %v754
    %826 = vmatmul.mubr.f32.gmra.mxu0 %v706
    %v827 = vpop.f32.mrf.mxu0
    %v828 = vadd.f32 %v748, %v827
    %v829 = vpop.f32.mrf.mxu0
    %830 = vdwg.mxu0
    %v831 = vmax.f32 %v823, 0.0
    %v832 = vmax.f32 %v828, 0.0
    %835 = vrot.lane.b32.xlu0 %v831, 127
    %v836 = vpop.permute.xlu0 %835
    %837 = vrot.lane.b32.xlu0 %v832, 127
    %v838 = vpop.permute.xlu0 %837
    %v841 = vmax.f32 %v831, %v836
    %v842 = vmax.f32 %v832, %v838
    %v845 = vrot.slane %v841, 2
    %v846 = vrot.slane %v842, 2
    %v847 = vsel %vm90, %v845, %v846
    %v850 = vmax.f32 %v841, %v847
    %v851 = vmax.f32 %v842, %v846
    %v852 = vld [vmem:[%s7] sm:$0xff]
    %v854 = vsel %vm448, %v850, 0
    %v857 = vsel %vm448, %v851, 0
    %859 = vmatprep.subr.mxu0 0.0
    %860 = vmatpush1.msra.mxu0 0.0
    %861 = vmatprep.subr.mxu0 0.0
    %862 = vmatpush1.msra.mxu0 0.0
    %863 = vmatprep.subr.mxu0 0.0
    %864 = vmatpush1.msra.mxu0 0.0
    %865 = vmatprep.subr.mxu0 0.0
    %866 = vmatpush1.msra.mxu0 0.0
    %867 = vmatprep.subr.mxu0 0.0
    %868 = vmatpush1.msra.mxu0 %v469
    %869 = vmatprep.subr.mxu0 0.0
    %870 = vmatpush1.msra.mxu0 %v446
    %871 = vmatprep.subr.mxu0 0.0
    %872 = vmatpush1.msra.mxu0 %v445
    %873 = vmatprep.subr.mxu0 0.0
    %874 = vmatpush1.msra.mxu0 %v444
    %875 = vmatprep.subr.mxu0 0.0
    %876 = vmatpush1.msra.mxu0 %v443
    %877 = vmatprep.subr.mxu0 0.0
    %878 = vmatpush1.msra.mxu0 %v442
    %879 = vmatprep.subr.mxu0 0.0
    %880 = vmatpush1.msra.mxu0 %v441
    %881 = vmatprep.subr.mxu0 0.0
    %882 = vmatpush1.msra.mxu0 %v440
    %883 = vmatprep.subr.mxu0 0.0
    %884 = vmatpush1.msra.mxu0 %v439
    %885 = vmatprep.subr.mxu0 0.0
    %886 = vmatpush1.msra.mxu0 %v438
    %887 = vmatprep.subr.mxu0 0.0
    %888 = vmatpush1.msra.mxu0 %v437
    %889 = vmatprep.subr.mxu0 0.0
    %890 = vmatpush1.msra.mxu0 %v436
    %891 = vmatprep.subr.mxu0 0.0
    %892 = vmatpush2.msra.mxu0 0.0
    %893 = vmatprep.subr.mxu0 0.0
    %894 = vmatpush2.msra.mxu0 0.0
    %895 = vmatprep.subr.mxu0 0.0
    %896 = vmatpush2.msra.mxu0 0.0
    %897 = vmatprep.subr.mxu0 0.0
    %898 = vmatpush2.msra.mxu0 0.0
    %899 = vmatprep.subr.mxu0 0.0
    %900 = vmatpush2.msra.mxu0 0.0
    %901 = vmatprep.subr.mxu0 0.0
    %902 = vmatpush2.msra.mxu0 0.0
    %903 = vmatprep.subr.mxu0 0.0
    %904 = vmatpush2.msra.mxu0 0.0
    %905 = vmatprep.subr.mxu0 0.0
    %906 = vmatpush2.msra.mxu0 0.0
    %907 = vmatprep.subr.mxu0 0.0
    %908 = vmatpush2.msra.mxu0 0.0
    %909 = vmatprep.subr.mxu0 0.0
    %910 = vmatpush2.msra.mxu0 0.0
    %911 = vmatprep.subr.mxu0 0.0
    %912 = vmatpush2.msra.mxu0 0.0
    %913 = vmatprep.subr.mxu0 0.0
    %914 = vmatpush2.msra.mxu0 0.0
    %915 = vmatprep.subr.mxu0 0.0
    %916 = vmatpush2.msra.mxu0 0.0
    %917 = vmatprep.subr.mxu0 0.0
    %918 = vmatpush2.msra.mxu0 0.0
    %919 = vmatprep.subr.mxu0 0.0
    %920 = vmatpush2.msra.mxu0 0.0
    %921 = vmatprep.subr.mxu0 0.0
    %922 = vmatpush2.msra.mxu0 0.0
    %923 = vmatprep.mubr.f32.mxu0 0.0
    %924 = vmatmul.mubr.f32.gmra.mxu0 %v854
    %v925 = vpop.f32.mrf.mxu0
    %v926 = vadd.f32 0.0, %v925
    %v927 = vpop.f32.mrf.mxu0
    %928 = vmatprep.mubr.f32.mxu0 0.0
    %929 = vmatmul.mubr.f32.gmra.mxu0 %v857
    %v930 = vpop.f32.mrf.mxu0
    %v931 = vadd.f32 0.0, %v930
    %v932 = vpop.f32.mrf.mxu0
    %933 = vdwg.mxu0
    %vm934 = vcmask 113664
    %v936 = vsel %vm934, %v852, 0
    %v939 = vsel %vm90, %v931, 0
    %941 = vmatprep.subr.mxu0 0.0
    %942 = vmatpush1.msra.mxu0 0.0
    %943 = vmatprep.subr.mxu0 0.0
    %944 = vmatpush1.msra.mxu0 0.0
    %945 = vmatprep.subr.mxu0 0.0
    %946 = vmatpush1.msra.mxu0 0.0
    %947 = vmatprep.subr.mxu0 0.0
    %948 = vmatpush1.msra.mxu0 0.0
    %949 = vmatprep.subr.mxu0 0.0
    %950 = vmatpush1.msra.mxu0 0.0
    %951 = vmatprep.subr.mxu0 0.0
    %952 = vmatpush1.msra.mxu0 0.0
    %953 = vmatprep.subr.mxu0 0.0
    %954 = vmatpush1.msra.mxu0 0.0
    %955 = vmatprep.subr.mxu0 0.0
    %956 = vmatpush1.msra.mxu0 0.0
    %957 = vmatprep.subr.mxu0 0.0
    %958 = vmatpush1.msra.mxu0 0.0
    %959 = vmatprep.subr.mxu0 0.0
    %960 = vmatpush1.msra.mxu0 0.0
    %961 = vmatprep.subr.mxu0 0.0
    %962 = vmatpush1.msra.mxu0 0.0
    %963 = vmatprep.subr.mxu0 0.0
    %964 = vmatpush1.msra.mxu0 0.0
    %965 = vmatprep.subr.mxu0 0.0
    %966 = vmatpush1.msra.mxu0 0.0
    %967 = vmatprep.subr.mxu0 0.0
    %968 = vmatpush1.msra.mxu0 0.0
    %969 = vmatprep.subr.mxu0 0.0
    %970 = vmatpush1.msra.mxu0 %v939
    %971 = vmatprep.subr.mxu0 0.0
    %972 = vmatpush1.msra.mxu0 %v926
    %973 = vmatprep.subr.mxu0 0.0
    %974 = vmatpush2.msra.mxu0 0.0
    %975 = vmatprep.subr.mxu0 0.0
    %976 = vmatpush2.msra.mxu0 0.0
    %977 = vmatprep.subr.mxu0 0.0
    %978 = vmatpush2.msra.mxu0 0.0
    %979 = vmatprep.subr.mxu0 0.0
    %980 = vmatpush2.msra.mxu0 0.0
    %981 = vmatprep.subr.mxu0 0.0
    %982 = vmatpush2.msra.mxu0 0.0
    %983 = vmatprep.subr.mxu0 0.0
    %984 = vmatpush2.msra.mxu0 0.0
    %985 = vmatprep.subr.mxu0 0.0
    %986 = vmatpush2.msra.mxu0 0.0
    %987 = vmatprep.subr.mxu0 0.0
    %988 = vmatpush2.msra.mxu0 0.0
    %989 = vmatprep.subr.mxu0 0.0
    %990 = vmatpush2.msra.mxu0 0.0
    %991 = vmatprep.subr.mxu0 0.0
    %992 = vmatpush2.msra.mxu0 0.0
    %993 = vmatprep.subr.mxu0 0.0
    %994 = vmatpush2.msra.mxu0 0.0
    %995 = vmatprep.subr.mxu0 0.0
    %996 = vmatpush2.msra.mxu0 0.0
    %997 = vmatprep.subr.mxu0 0.0
    %998 = vmatpush2.msra.mxu0 0.0
    %999 = vmatprep.subr.mxu0 0.0
    %1000 = vmatpush2.msra.mxu0 0.0
    %1001 = vmatprep.subr.mxu0 0.0
    %1002 = vmatpush2.msra.mxu0 0.0
    %1003 = vmatprep.subr.mxu0 0.0
    %1004 = vmatpush2.msra.mxu0 0.0
    %1005 = vmatprep.mubr.f32.mxu0 0.0
    %1006 = vmatmul.mubr.f32.gmra.mxu0 %v936
    %v1007 = vpop.f32.mrf.mxu0
    %v1008 = vadd.f32 0.0, %v1007
    %v1009 = vpop.f32.mrf.mxu0
    %1010 = vdwg.mxu0
    %v1011 = vld [vmem:[%s8] sm:$0xff]
    %v1012 = vld [vmem:[%s8 + $0x8] sm:$0xff]
    %v1013 = vld [vmem:[%s8 + $0x10] sm:$0xff]
    %v1014 = vld [vmem:[%s8 + $0x18] sm:$0xff]
    %v1015 = vld [vmem:[%s8 + $0x20] sm:$0xff]
    %v1016 = vld [vmem:[%s8 + $0x28] sm:$0xff]
    %v1017 = vld [vmem:[%s8 + $0x30] sm:$0xff]
    %v1018 = vld [vmem:[%s8 + $0x38] sm:$0xff]
    %v1019 = vld [vmem:[%s8 + $0x40] sm:$0xff]
    %v1020 = vld [vmem:[%s8 + $0x48] sm:$0xff]
    %v1021 = vld [vmem:[%s8 + $0x50] sm:$0xff]
    %v1022 = vld [vmem:[%s8 + $0x58] sm:$0xff]
    %v1023 = vld [vmem:[%s8 + $0x60] sm:$0xff]
    %v1024 = vld [vmem:[%s8 + $0x68] sm:$0xff]
    %v1025 = vld [vmem:[%s8 + $0x70] sm:$0xff]
    %v1026 = vld [vmem:[%s8 + $0x78] sm:$0xff]
    %v1027 = vld [vmem:[%s8 + $0x80] sm:$0xff]
    %v1028 = vld [vmem:[%s8 + $0x88] sm:$0xff]
    %v1029 = vld [vmem:[%s8 + $0x90] sm:$0xff]
    %v1030 = vld [vmem:[%s8 + $0x98] sm:$0xff]
    %v1031 = vld [vmem:[%s8 + $0xa0] sm:$0xff]
    %v1032 = vld [vmem:[%s8 + $0xa8] sm:$0xff]
    %v1033 = vld [vmem:[%s8 + $0xb0] sm:$0xff]
    %v1034 = vld [vmem:[%s8 + $0xb8] sm:$0xff]
    %v1035 = vld [vmem:[%s8 + $0xc0] sm:$0xff]
    %v1036 = vld [vmem:[%s8 + $0xc8] sm:$0xff]
    %v1037 = vld [vmem:[%s8 + $0xd0] sm:$0xff]
    %v1038 = vld [vmem:[%s8 + $0xd8] sm:$0xff]
    %v1039 = vld [vmem:[%s8 + $0xe0] sm:$0xff]
    %v1040 = vld [vmem:[%s8 + $0xe8] sm:$0xff]
    %v1041 = vld [vmem:[%s8 + $0xf0] sm:$0xff]
    %v1042 = vld [vmem:[%s8 + $0xf8] sm:$0xff]
    %v1043 = vld [vmem:[%s8 + $0x100] sm:$0xff]
    %v1044 = vld [vmem:[%s8 + $0x108] sm:$0xff]
    %v1045 = vld [vmem:[%s8 + $0x110] sm:$0xff]
    %v1046 = vld [vmem:[%s8 + $0x118] sm:$0xff]
    %v1047 = vld [vmem:[%s8 + $0x120] sm:$0xff]
    %v1048 = vld [vmem:[%s8 + $0x128] sm:$0xff]
    %v1049 = vld [vmem:[%s8 + $0x130] sm:$0xff]
    %v1050 = vld [vmem:[%s8 + $0x138] sm:$0xff]
    %v1051 = vld [vmem:[%s8 + $0x140] sm:$0xff]
    %v1052 = vld [vmem:[%s8 + $0x148] sm:$0xff]
    %v1053 = vld [vmem:[%s8 + $0x150] sm:$0xff]
    %v1054 = vld [vmem:[%s8 + $0x158] sm:$0xff]
    %v1055 = vld [vmem:[%s8 + $0x160] sm:$0xff]
    %v1056 = vld [vmem:[%s8 + $0x168] sm:$0xff]
    %v1057 = vld [vmem:[%s8 + $0x170] sm:$0xff]
    %v1058 = vld [vmem:[%s8 + $0x178] sm:$0xff]
    %v1060 = vsel %vm701, %v1008, 0
    %1062 = vmatprep.subr.mxu0 0.0
    %1063 = vmatpush1.msra.mxu0 0.0
    %1064 = vmatprep.subr.mxu0 0.0
    %1065 = vmatpush1.msra.mxu0 0.0
    %1066 = vmatprep.subr.mxu0 0.0
    %1067 = vmatpush1.msra.mxu0 0.0
    %1068 = vmatprep.subr.mxu0 0.0
    %1069 = vmatpush1.msra.mxu0 0.0
    %1070 = vmatprep.subr.mxu0 0.0
    %1071 = vmatpush1.msra.mxu0 0.0
    %1072 = vmatprep.subr.mxu0 0.0
    %1073 = vmatpush1.msra.mxu0 0.0
    %1074 = vmatprep.subr.mxu0 0.0
    %1075 = vmatpush1.msra.mxu0 0.0
    %1076 = vmatprep.subr.mxu0 0.0
    %1077 = vmatpush1.msra.mxu0 0.0
    %1078 = vmatprep.subr.mxu0 0.0
    %1079 = vmatpush1.msra.mxu0 0.0
    %1080 = vmatprep.subr.mxu0 0.0
    %1081 = vmatpush1.msra.mxu0 0.0
    %1082 = vmatprep.subr.mxu0 %v1052
    %1083 = vmatpush1.msra.mxu0 %v1051
    %1084 = vmatprep.subr.mxu0 %v1044
    %1085 = vmatpush1.msra.mxu0 %v1043
    %1086 = vmatprep.subr.mxu0 %v1036
    %1087 = vmatpush1.msra.mxu0 %v1035
    %1088 = vmatprep.subr.mxu0 %v1028
    %1089 = vmatpush1.msra.mxu0 %v1027
    %1090 = vmatprep.subr.mxu0 %v1020
    %1091 = vmatpush1.msra.mxu0 %v1019
    %1092 = vmatprep.subr.mxu0 %v1012
    %1093 = vmatpush1.msra.mxu0 %v1011
    %1094 = vmatprep.subr.mxu0 0.0
    %1095 = vmatpush2.msra.mxu0 0.0
    %1096 = vmatprep.subr.mxu0 0.0
    %1097 = vmatpush2.msra.mxu0 0.0
    %1098 = vmatprep.subr.mxu0 0.0
    %1099 = vmatpush2.msra.mxu0 0.0
    %1100 = vmatprep.subr.mxu0 0.0
    %1101 = vmatpush2.msra.mxu0 0.0
    %1102 = vmatprep.subr.mxu0 0.0
    %1103 = vmatpush2.msra.mxu0 0.0
    %1104 = vmatprep.subr.mxu0 0.0
    %1105 = vmatpush2.msra.mxu0 0.0
    %1106 = vmatprep.subr.mxu0 0.0
    %1107 = vmatpush2.msra.mxu0 0.0
    %1108 = vmatprep.subr.mxu0 0.0
    %1109 = vmatpush2.msra.mxu0 0.0
    %1110 = vmatprep.subr.mxu0 0.0
    %1111 = vmatpush2.msra.mxu0 0.0
    %1112 = vmatprep.subr.mxu0 0.0
    %1113 = vmatpush2.msra.mxu0 0.0
    %1114 = vmatprep.subr.mxu0 0.0
    %1115 = vmatpush2.msra.mxu0 0.0
    %1116 = vmatprep.subr.mxu0 0.0
    %1117 = vmatpush2.msra.mxu0 0.0
    %1118 = vmatprep.subr.mxu0 0.0
    %1119 = vmatpush2.msra.mxu0 0.0
    %1120 = vmatprep.subr.mxu0 0.0
    %1121 = vmatpush2.msra.mxu0 0.0
    %1122 = vmatprep.subr.mxu0 0.0
    %1123 = vmatpush2.msra.mxu0 0.0
    %1124 = vmatprep.subr.mxu0 0.0
    %1125 = vmatpush2.msra.mxu0 0.0
    %1126 = vmatprep.mubr.f32.mxu0 0.0
    %1127 = vmatmul.mubr.f32.gmra.mxu0 %v1060
    %v1128 = vpop.f32.mrf.mxu0
    %v1129 = vadd.f32 0.0, %v1128
    %v1130 = vpop.f32.mrf.mxu0
    %v1131 = vadd.f32 0.0, %v1130
    %1132 = vdwg.mxu0
    %1133 = vmatprep.subr.mxu0 0.0
    %1134 = vmatpush1.msra.mxu0 0.0
    %1135 = vmatprep.subr.mxu0 0.0
    %1136 = vmatpush1.msra.mxu0 0.0
    %1137 = vmatprep.subr.mxu0 0.0
    %1138 = vmatpush1.msra.mxu0 0.0
    %1139 = vmatprep.subr.mxu0 0.0
    %1140 = vmatpush1.msra.mxu0 0.0
    %1141 = vmatprep.subr.mxu0 0.0
    %1142 = vmatpush1.msra.mxu0 0.0
    %1143 = vmatprep.subr.mxu0 0.0
    %1144 = vmatpush1.msra.mxu0 0.0
    %1145 = vmatprep.subr.mxu0 0.0
    %1146 = vmatpush1.msra.mxu0 0.0
    %1147 = vmatprep.subr.mxu0 0.0
    %1148 = vmatpush1.msra.mxu0 0.0
    %1149 = vmatprep.subr.mxu0 0.0
    %1150 = vmatpush1.msra.mxu0 0.0
    %1151 = vmatprep.subr.mxu0 0.0
    %1152 = vmatpush1.msra.mxu0 0.0
    %1153 = vmatprep.subr.mxu0 %v1054
    %1154 = vmatpush1.msra.mxu0 %v1053
    %1155 = vmatprep.subr.mxu0 %v1046
    %1156 = vmatpush1.msra.mxu0 %v1045
    %1157 = vmatprep.subr.mxu0 %v1038
    %1158 = vmatpush1.msra.mxu0 %v1037
    %1159 = vmatprep.subr.mxu0 %v1030
    %1160 = vmatpush1.msra.mxu0 %v1029
    %1161 = vmatprep.subr.mxu0 %v1022
    %1162 = vmatpush1.msra.mxu0 %v1021
    %1163 = vmatprep.subr.mxu0 %v1014
    %1164 = vmatpush1.msra.mxu0 %v1013
    %1165 = vmatprep.subr.mxu0 0.0
    %1166 = vmatpush2.msra.mxu0 0.0
    %1167 = vmatprep.subr.mxu0 0.0
    %1168 = vmatpush2.msra.mxu0 0.0
    %1169 = vmatprep.subr.mxu0 0.0
    %1170 = vmatpush2.msra.mxu0 0.0
    %1171 = vmatprep.subr.mxu0 0.0
    %1172 = vmatpush2.msra.mxu0 0.0
    %1173 = vmatprep.subr.mxu0 0.0
    %1174 = vmatpush2.msra.mxu0 0.0
    %1175 = vmatprep.subr.mxu0 0.0
    %1176 = vmatpush2.msra.mxu0 0.0
    %1177 = vmatprep.subr.mxu0 0.0
    %1178 = vmatpush2.msra.mxu0 0.0
    %1179 = vmatprep.subr.mxu0 0.0
    %1180 = vmatpush2.msra.mxu0 0.0
    %1181 = vmatprep.subr.mxu0 0.0
    %1182 = vmatpush2.msra.mxu0 0.0
    %1183 = vmatprep.subr.mxu0 0.0
    %1184 = vmatpush2.msra.mxu0 0.0
    %1185 = vmatprep.subr.mxu0 0.0
    %1186 = vmatpush2.msra.mxu0 0.0
    %1187 = vmatprep.subr.mxu0 0.0
    %1188 = vmatpush2.msra.mxu0 0.0
    %1189 = vmatprep.subr.mxu0 0.0
    %1190 = vmatpush2.msra.mxu0 0.0
    %1191 = vmatprep.subr.mxu0 0.0
    %1192 = vmatpush2.msra.mxu0 0.0
    %1193 = vmatprep.subr.mxu0 0.0
    %1194 = vmatpush2.msra.mxu0 0.0
    %1195 = vmatprep.subr.mxu0 0.0
    %1196 = vmatpush2.msra.mxu0 0.0
    %1197 = vmatprep.mubr.f32.mxu0 0.0
    %1198 = vmatmul.mubr.f32.gmra.mxu0 %v1060
    %v1199 = vpop.f32.mrf.mxu0
    %v1200 = vadd.f32 0.0, %v1199
    %v1201 = vpop.f32.mrf.mxu0
    %v1202 = vadd.f32 0.0, %v1201
    %1203 = vdwg.mxu0
    %1204 = vmatprep.subr.mxu0 0.0
    %1205 = vmatpush1.msra.mxu0 0.0
    %1206 = vmatprep.subr.mxu0 0.0
    %1207 = vmatpush1.msra.mxu0 0.0
    %1208 = vmatprep.subr.mxu0 0.0
    %1209 = vmatpush1.msra.mxu0 0.0
    %1210 = vmatprep.subr.mxu0 0.0
    %1211 = vmatpush1.msra.mxu0 0.0
    %1212 = vmatprep.subr.mxu0 0.0
    %1213 = vmatpush1.msra.mxu0 0.0
    %1214 = vmatprep.subr.mxu0 0.0
    %1215 = vmatpush1.msra.mxu0 0.0
    %1216 = vmatprep.subr.mxu0 0.0
    %1217 = vmatpush1.msra.mxu0 0.0
    %1218 = vmatprep.subr.mxu0 0.0
    %1219 = vmatpush1.msra.mxu0 0.0
    %1220 = vmatprep.subr.mxu0 0.0
    %1221 = vmatpush1.msra.mxu0 0.0
    %1222 = vmatprep.subr.mxu0 0.0
    %1223 = vmatpush1.msra.mxu0 0.0
    %1224 = vmatprep.subr.mxu0 %v1056
    %1225 = vmatpush1.msra.mxu0 %v1055
    %1226 = vmatprep.subr.mxu0 %v1048
    %1227 = vmatpush1.msra.mxu0 %v1047
    %1228 = vmatprep.subr.mxu0 %v1040
    %1229 = vmatpush1.msra.mxu0 %v1039
    %1230 = vmatprep.subr.mxu0 %v1032
    %1231 = vmatpush1.msra.mxu0 %v1031
    %1232 = vmatprep.subr.mxu0 %v1024
    %1233 = vmatpush1.msra.mxu0 %v1023
    %1234 = vmatprep.subr.mxu0 %v1016
    %1235 = vmatpush1.msra.mxu0 %v1015
    %1236 = vmatprep.subr.mxu0 0.0
    %1237 = vmatpush2.msra.mxu0 0.0
    %1238 = vmatprep.subr.mxu0 0.0
    %1239 = vmatpush2.msra.mxu0 0.0
    %1240 = vmatprep.subr.mxu0 0.0
    %1241 = vmatpush2.msra.mxu0 0.0
    %1242 = vmatprep.subr.mxu0 0.0
    %1243 = vmatpush2.msra.mxu0 0.0
    %1244 = vmatprep.subr.mxu0 0.0
    %1245 = vmatpush2.msra.mxu0 0.0
    %1246 = vmatprep.subr.mxu0 0.0
    %1247 = vmatpush2.msra.mxu0 0.0
    %1248 = vmatprep.subr.mxu0 0.0
    %1249 = vmatpush2.msra.mxu0 0.0
    %1250 = vmatprep.subr.mxu0 0.0
    %1251 = vmatpush2.msra.mxu0 0.0
    %1252 = vmatprep.subr.mxu0 0.0
    %1253 = vmatpush2.msra.mxu0 0.0
    %1254 = vmatprep.subr.mxu0 0.0
    %1255 = vmatpush2.msra.mxu0 0.0
    %1256 = vmatprep.subr.mxu0 0.0
    %1257 = vmatpush2.msra.mxu0 0.0
    %1258 = vmatprep.subr.mxu0 0.0
    %1259 = vmatpush2.msra.mxu0 0.0
    %1260 = vmatprep.subr.mxu0 0.0
    %1261 = vmatpush2.msra.mxu0 0.0
    %1262 = vmatprep.subr.mxu0 0.0
    %1263 = vmatpush2.msra.mxu0 0.0
    %1264 = vmatprep.subr.mxu0 0.0
    %1265 = vmatpush2.msra.mxu0 0.0
    %1266 = vmatprep.subr.mxu0 0.0
    %1267 = vmatpush2.msra.mxu0 0.0
    %1268 = vmatprep.mubr.f32.mxu0 0.0
    %1269 = vmatmul.mubr.f32.gmra.mxu0 %v1060
    %v1270 = vpop.f32.mrf.mxu0
    %v1271 = vadd.f32 0.0, %v1270
    %v1272 = vpop.f32.mrf.mxu0
    %v1273 = vadd.f32 0.0, %v1272
    %1274 = vdwg.mxu0
    %1275 = vmatprep.subr.mxu0 0.0
    %1276 = vmatpush1.msra.mxu0 0.0
    %1277 = vmatprep.subr.mxu0 0.0
    %1278 = vmatpush1.msra.mxu0 0.0
    %1279 = vmatprep.subr.mxu0 0.0
    %1280 = vmatpush1.msra.mxu0 0.0
    %1281 = vmatprep.subr.mxu0 0.0
    %1282 = vmatpush1.msra.mxu0 0.0
    %1283 = vmatprep.subr.mxu0 0.0
    %1284 = vmatpush1.msra.mxu0 0.0
    %1285 = vmatprep.subr.mxu0 0.0
    %1286 = vmatpush1.msra.mxu0 0.0
    %1287 = vmatprep.subr.mxu0 0.0
    %1288 = vmatpush1.msra.mxu0 0.0
    %1289 = vmatprep.subr.mxu0 0.0
    %1290 = vmatpush1.msra.mxu0 0.0
    %1291 = vmatprep.subr.mxu0 0.0
    %1292 = vmatpush1.msra.mxu0 0.0
    %1293 = vmatprep.subr.mxu0 0.0
    %1294 = vmatpush1.msra.mxu0 0.0
    %1295 = vmatprep.subr.mxu0 %v1058
    %1296 = vmatpush1.msra.mxu0 %v1057
    %1297 = vmatprep.subr.mxu0 %v1050
    %1298 = vmatpush1.msra.mxu0 %v1049
    %1299 = vmatprep.subr.mxu0 %v1042
    %1300 = vmatpush1.msra.mxu0 %v1041
    %1301 = vmatprep.subr.mxu0 %v1034
    %1302 = vmatpush1.msra.mxu0 %v1033
    %1303 = vmatprep.subr.mxu0 %v1026
    %1304 = vmatpush1.msra.mxu0 %v1025
    %1305 = vmatprep.subr.mxu0 %v1018
    %1306 = vmatpush1.msra.mxu0 %v1017
    %1307 = vmatprep.subr.mxu0 0.0
    %1308 = vmatpush2.msra.mxu0 0.0
    %1309 = vmatprep.subr.mxu0 0.0
    %1310 = vmatpush2.msra.mxu0 0.0
    %1311 = vmatprep.subr.mxu0 0.0
    %1312 = vmatpush2.msra.mxu0 0.0
    %1313 = vmatprep.subr.mxu0 0.0
    %1314 = vmatpush2.msra.mxu0 0.0
    %1315 = vmatprep.subr.mxu0 0.0
    %1316 = vmatpush2.msra.mxu0 0.0
    %1317 = vmatprep.subr.mxu0 0.0
    %1318 = vmatpush2.msra.mxu0 0.0
    %1319 = vmatprep.subr.mxu0 0.0
    %1320 = vmatpush2.msra.mxu0 0.0
    %1321 = vmatprep.subr.mxu0 0.0
    %1322 = vmatpush2.msra.mxu0 0.0
    %1323 = vmatprep.subr.mxu0 0.0
    %1324 = vmatpush2.msra.mxu0 0.0
    %1325 = vmatprep.subr.mxu0 0.0
    %1326 = vmatpush2.msra.mxu0 0.0
    %1327 = vmatprep.subr.mxu0 0.0
    %1328 = vmatpush2.msra.mxu0 0.0
    %1329 = vmatprep.subr.mxu0 0.0
    %1330 = vmatpush2.msra.mxu0 0.0
    %1331 = vmatprep.subr.mxu0 0.0
    %1332 = vmatpush2.msra.mxu0 0.0
    %1333 = vmatprep.subr.mxu0 0.0
    %1334 = vmatpush2.msra.mxu0 0.0
    %1335 = vmatprep.subr.mxu0 0.0
    %1336 = vmatpush2.msra.mxu0 0.0
    %1337 = vmatprep.subr.mxu0 0.0
    %1338 = vmatpush2.msra.mxu0 0.0
    %1339 = vmatprep.mubr.f32.mxu0 0.0
    %1340 = vmatmul.mubr.f32.gmra.mxu0 %v1060
    %v1341 = vpop.f32.mrf.mxu0
    %v1342 = vadd.f32 0.0, %v1341
    %v1343 = vpop.f32.mrf.mxu0
    %v1344 = vadd.f32 0.0, %v1343
    %1345 = vdwg.mxu0
    %v1346 = vld [vmem:[%s9] sm:$0x3]
    %v1348 = vlaneseq
    %v1349 = vshrl.u32 %v1348, 7
    %v1350 = vsub.s32 0, %v1349
    %v1351 = vrot.slane %v1346, %v1350
    %v1352 = vlaneseq
    %v1353 = vshrl.u32 %v1352, 7
    %v1354 = vsub.s32 1, %v1353
    %v1355 = vrot.slane %v1346, %v1354
    %v1358 = vadd.f32 %v1351, %v1129
    %v1359 = vadd.f32 %v1355, %v1131
    %v1362 = vrot.slane %v1200, 2
    %v1363 = vrot.slane %v1202, 2
    %v1366 = vadd.f32 %v1358, %v1362
    %v1367 = vadd.f32 %v1359, %v1363
    %v1370 = vrot.slane %v1271, 4
    %v1371 = vrot.slane %v1273, 4
    %v1374 = vadd.f32 %v1366, %v1370
    %v1375 = vadd.f32 %v1367, %v1371
    %v1378 = vrot.slane %v1342, 6
    %v1379 = vrot.slane %v1344, 6
    %v1382 = vadd.f32 %v1374, %v1378
    %v1383 = vadd.f32 %v1375, %v1379
    %v1384 = vmax.f32 %v1382, 0.0
    %v1385 = vmax.f32 %v1383, 0.0
    %v1386 = vld [vmem:[%s10] sm:$0xff]
    %v1387 = vld [vmem:[%s10 + $0x8] sm:$0xff]
    %v1388 = vld [vmem:[%s10 + $0x10] sm:$0xff]
    %v1389 = vld [vmem:[%s10 + $0x18] sm:$0xff]
    %v1390 = vld [vmem:[%s10 + $0x20] sm:$0xff]
    %v1391 = vld [vmem:[%s10 + $0x28] sm:$0xff]
    %v1392 = vld [vmem:[%s10 + $0x30] sm:$0xff]
    %v1393 = vld [vmem:[%s10 + $0x38] sm:$0xff]
    %v1394 = vld [vmem:[%s10 + $0x40] sm:$0xff]
    %v1395 = vld [vmem:[%s10 + $0x48] sm:$0xff]
    %v1396 = vld [vmem:[%s10 + $0x50] sm:$0xff]
    %v1397 = vld [vmem:[%s10 + $0x58] sm:$0xff]
    %v1398 = vld [vmem:[%s10 + $0x60] sm:$0xff]
    %v1399 = vld [vmem:[%s10 + $0x68] sm:$0xff]
    %v1400 = vld [vmem:[%s10 + $0x70] sm:$0xff]
    %v1401 = vld [vmem:[%s10 + $0x78] sm:$0xff]
    %v1402 = vld [vmem:[%s10 + $0x80] sm:$0xff]
    %v1403 = vld [vmem:[%s10 + $0x88] sm:$0xff]
    %v1404 = vld [vmem:[%s10 + $0x90] sm:$0xff]
    %v1405 = vld [vmem:[%s10 + $0x98] sm:$0xff]
    %v1406 = vld [vmem:[%s10 + $0xa0] sm:$0xff]
    %v1407 = vld [vmem:[%s10 + $0xa8] sm:$0xff]
    %v1408 = vld [vmem:[%s10 + $0xb0] sm:$0xff]
    %v1409 = vld [vmem:[%s10 + $0xb8] sm:$0xff]
    %v1410 = vld [vmem:[%s10 + $0xc0] sm:$0xff]
    %v1411 = vld [vmem:[%s10 + $0xc8] sm:$0xff]
    %v1412 = vld [vmem:[%s10 + $0xd0] sm:$0xff]
    %v1413 = vld [vmem:[%s10 + $0xd8] sm:$0xff]
    %v1414 = vld [vmem:[%s10 + $0xe0] sm:$0xff]
    %v1415 = vld [vmem:[%s10 + $0xe8] sm:$0xff]
    %v1416 = vld [vmem:[%s10 + $0xf0] sm:$0xff]
    %v1417 = vld [vmem:[%s10 + $0xf8] sm:$0xff]
    %v1418 = vld [vmem:[%s11] sm:$0x1]
    %v1420 = vlaneseq
    %v1421 = vshrl.u32 %v1420, 7
    %v1422 = vsub.s32 0, %v1421
    %v1423 = vrot.slane %v1418, %v1422
    %1425 = vmatprep.subr.mxu0 0.0
    %1426 = vmatpush1.msra.mxu0 %v1401
    %1427 = vmatprep.subr.mxu0 0.0
    %1428 = vmatpush1.msra.mxu0 %v1400
    %1429 = vmatprep.subr.mxu0 0.0
    %1430 = vmatpush1.msra.mxu0 %v1399
    %1431 = vmatprep.subr.mxu0 0.0
    %1432 = vmatpush1.msra.mxu0 %v1398
    %1433 = vmatprep.subr.mxu0 0.0
    %1434 = vmatpush1.msra.mxu0 %v1397
    %1435 = vmatprep.subr.mxu0 0.0
    %1436 = vmatpush1.msra.mxu0 %v1396
    %1437 = vmatprep.subr.mxu0 0.0
    %1438 = vmatpush1.msra.mxu0 %v1395
    %1439 = vmatprep.subr.mxu0 0.0
    %1440 = vmatpush1.msra.mxu0 %v1394
    %1441 = vmatprep.subr.mxu0 0.0
    %1442 = vmatpush1.msra.mxu0 %v1393
    %1443 = vmatprep.subr.mxu0 0.0
    %1444 = vmatpush1.msra.mxu0 %v1392
    %1445 = vmatprep.subr.mxu0 0.0
    %1446 = vmatpush1.msra.mxu0 %v1391
    %1447 = vmatprep.subr.mxu0 0.0
    %1448 = vmatpush1.msra.mxu0 %v1390
    %1449 = vmatprep.subr.mxu0 0.0
    %1450 = vmatpush1.msra.mxu0 %v1389
    %1451 = vmatprep.subr.mxu0 0.0
    %1452 = vmatpush1.msra.mxu0 %v1388
    %1453 = vmatprep.subr.mxu0 0.0
    %1454 = vmatpush1.msra.mxu0 %v1387
    %1455 = vmatprep.subr.mxu0 0.0
    %1456 = vmatpush1.msra.mxu0 %v1386
    %1457 = vmatprep.subr.mxu0 0.0
    %1458 = vmatpush2.msra.mxu0 %v1417
    %1459 = vmatprep.subr.mxu0 0.0
    %1460 = vmatpush2.msra.mxu0 %v1416
    %1461 = vmatprep.subr.mxu0 0.0
    %1462 = vmatpush2.msra.mxu0 %v1415
    %1463 = vmatprep.subr.mxu0 0.0
    %1464 = vmatpush2.msra.mxu0 %v1414
    %1465 = vmatprep.subr.mxu0 0.0
    %1466 = vmatpush2.msra.mxu0 %v1413
    %1467 = vmatprep.subr.mxu0 0.0
    %1468 = vmatpush2.msra.mxu0 %v1412
    %1469 = vmatprep.subr.mxu0 0.0
    %1470 = vmatpush2.msra.mxu0 %v1411
    %1471 = vmatprep.subr.mxu0 0.0
    %1472 = vmatpush2.msra.mxu0 %v1410
    %1473 = vmatprep.subr.mxu0 0.0
    %1474 = vmatpush2.msra.mxu0 %v1409
    %1475 = vmatprep.subr.mxu0 0.0
    %1476 = vmatpush2.msra.mxu0 %v1408
    %1477 = vmatprep.subr.mxu0 0.0
    %1478 = vmatpush2.msra.mxu0 %v1407
    %1479 = vmatprep.subr.mxu0 0.0
    %1480 = vmatpush2.msra.mxu0 %v1406
    %1481 = vmatprep.subr.mxu0 0.0
    %1482 = vmatpush2.msra.mxu0 %v1405
    %1483 = vmatprep.subr.mxu0 0.0
    %1484 = vmatpush2.msra.mxu0 %v1404
    %1485 = vmatprep.subr.mxu0 0.0
    %1486 = vmatpush2.msra.mxu0 %v1403
    %1487 = vmatprep.subr.mxu0 0.0
    %1488 = vmatpush2.msra.mxu0 %v1402
    %1489 = vmatprep.mubr.f32.mxu0 %v1385
    %1490 = vmatmul.mubr.f32.gmra.mxu0 %v1384
    %v1491 = vpop.f32.mrf.mxu0
    %v1492 = vadd.f32 %v1423, %v1491
    %v1493 = vpop.f32.mrf.mxu0
    %1494 = vdwg.mxu0
    %v1495 = vmax.f32 %v1492, 0.0
    %v1496 = vld [vmem:[#allocation5] sm:$0xff]
    %v1497 = vld [vmem:[#allocation5 + $0x8] sm:$0xff]
    %v1498 = vld [vmem:[#allocation5 + $0x10] sm:$0xff]
    %v1499 = vld [vmem:[#allocation5 + $0x18] sm:$0xff]
    %v1500 = vld [vmem:[#allocation5 + $0x20] sm:$0xff]
    %v1501 = vld [vmem:[#allocation5 + $0x28] sm:$0xff]
    %v1502 = vld [vmem:[#allocation5 + $0x30] sm:$0xff]
    %v1503 = vld [vmem:[#allocation5 + $0x38] sm:$0xff]
    %v1504 = vld [vmem:[#allocation5 + $0x40] sm:$0xff]
    %v1505 = vld [vmem:[#allocation5 + $0x48] sm:$0xff]
    %v1506 = vld [vmem:[#allocation5 + $0x50] sm:$0xff]
    %v1507 = vld [vmem:[#allocation5 + $0x58] sm:$0xff]
    %v1508 = vld [vmem:[#allocation5 + $0x60] sm:$0xff]
    %v1509 = vld [vmem:[#allocation5 + $0x68] sm:$0xff]
    %v1510 = vld [vmem:[#allocation5 + $0x70] sm:$0xff]
    %v1511 = vld [vmem:[#allocation5 + $0x78] sm:$0xff]
    %v1512 = vld [vmem:[%s13] sm:$0x1]
    %v1514 = vlaneseq
    %v1515 = vshrl.u32 %v1514, 7
    %v1516 = vsub.s32 0, %v1515
    %v1517 = vrot.slane %v1512, %v1516
    %1519 = vmatprep.subr.mxu0 0.0
    %1520 = vmatpush1.msra.mxu0 %v1511
    %1521 = vmatprep.subr.mxu0 0.0
    %1522 = vmatpush1.msra.mxu0 %v1510
    %1523 = vmatprep.subr.mxu0 0.0
    %1524 = vmatpush1.msra.mxu0 %v1509
    %1525 = vmatprep.subr.mxu0 0.0
    %1526 = vmatpush1.msra.mxu0 %v1508
    %1527 = vmatprep.subr.mxu0 0.0
    %1528 = vmatpush1.msra.mxu0 %v1507
    %1529 = vmatprep.subr.mxu0 0.0
    %1530 = vmatpush1.msra.mxu0 %v1506
    %1531 = vmatprep.subr.mxu0 0.0
    %1532 = vmatpush1.msra.mxu0 %v1505
    %1533 = vmatprep.subr.mxu0 0.0
    %1534 = vmatpush1.msra.mxu0 %v1504
    %1535 = vmatprep.subr.mxu0 0.0
    %1536 = vmatpush1.msra.mxu0 %v1503
    %1537 = vmatprep.subr.mxu0 0.0
    %1538 = vmatpush1.msra.mxu0 %v1502
    %1539 = vmatprep.subr.mxu0 0.0
    %1540 = vmatpush1.msra.mxu0 %v1501
    %1541 = vmatprep.subr.mxu0 0.0
    %1542 = vmatpush1.msra.mxu0 %v1500
    %1543 = vmatprep.subr.mxu0 0.0
    %1544 = vmatpush1.msra.mxu0 %v1499
    %1545 = vmatprep.subr.mxu0 0.0
    %1546 = vmatpush1.msra.mxu0 %v1498
    %1547 = vmatprep.subr.mxu0 0.0
    %1548 = vmatpush1.msra.mxu0 %v1497
    %1549 = vmatprep.subr.mxu0 0.0
    %1550 = vmatpush1.msra.mxu0 %v1496
    %1551 = vmatprep.subr.mxu0 0.0
    %1552 = vmatpush2.msra.mxu0 0.0
    %1553 = vmatprep.subr.mxu0 0.0
    %1554 = vmatpush2.msra.mxu0 0.0
    %1555 = vmatprep.subr.mxu0 0.0
    %1556 = vmatpush2.msra.mxu0 0.0
    %1557 = vmatprep.subr.mxu0 0.0
    %1558 = vmatpush2.msra.mxu0 0.0
    %1559 = vmatprep.subr.mxu0 0.0
    %1560 = vmatpush2.msra.mxu0 0.0
    %1561 = vmatprep.subr.mxu0 0.0
    %1562 = vmatpush2.msra.mxu0 0.0
    %1563 = vmatprep.subr.mxu0 0.0
    %1564 = vmatpush2.msra.mxu0 0.0
    %1565 = vmatprep.subr.mxu0 0.0
    %1566 = vmatpush2.msra.mxu0 0.0
    %1567 = vmatprep.subr.mxu0 0.0
    %1568 = vmatpush2.msra.mxu0 0.0
    %1569 = vmatprep.subr.mxu0 0.0
    %1570 = vmatpush2.msra.mxu0 0.0
    %1571 = vmatprep.subr.mxu0 0.0
    %1572 = vmatpush2.msra.mxu0 0.0
    %1573 = vmatprep.subr.mxu0 0.0
    %1574 = vmatpush2.msra.mxu0 0.0
    %1575 = vmatprep.subr.mxu0 0.0
    %1576 = vmatpush2.msra.mxu0 0.0
    %1577 = vmatprep.subr.mxu0 0.0
    %1578 = vmatpush2.msra.mxu0 0.0
    %1579 = vmatprep.subr.mxu0 0.0
    %1580 = vmatpush2.msra.mxu0 0.0
    %1581 = vmatprep.subr.mxu0 0.0
    %1582 = vmatpush2.msra.mxu0 0.0
    %1583 = vmatprep.mubr.f32.mxu0 0.0
    %1584 = vmatmul.mubr.f32.gmra.mxu0 %v1495
    %v1585 = vpop.f32.mrf.mxu0
    %v1586 = vadd.f32 %v1517, %v1585
    %v1587 = vpop.f32.mrf.mxu0
    %1588 = vdwg.mxu0
    %1589 = vst [vmem:[#allocation7] sm:$0x3] %v1586
    // Predicated region
    $region66: #{cnn_forward.1} parent=1 // pred_check
      _
    $region67: #{cnn_forward.1} parent=1 // pred_check_branch
      %1591 = sbr.rel (0) target = $region69
    $region68: #{cnn_forward.1} parent=1 // pred_region
      %s1593 = ssub.s32 32, 32
      %1594 = vsyncadd [#allocation4], %s1593
      %s1596 = sshll.u32 [#allocation7], 4
      %s1597 = int_to_ptr.vmem [resolvable:$true] %s1596
      %1599 = dma.vmem_to_hbm [thread:$0]  %s1597, 32, %s14, [#allocation4]
    $region69: #{cnn_forward.1} parent=1 // pred_fallthru
      _
    // Predicated region
    $region70: #{cnn_forward.1} parent=1 // pred_check
      _
    $region71: #{cnn_forward.1} parent=1 // pred_check_branch
      %1601 = sbr.rel (0) target = $region73
    $region72: #{cnn_forward.1} parent=1 // pred_region
      %1602 = dma.done [#allocation4], 32
    $region73: #{cnn_forward.1} parent=1 // pred_fallthru
      _
    %1603 = vsyncpa [#allocation3], 1
    %1604 = vsyncpa [#allocation6], 1
    %1605 = vsyncpa [#allocation4], 1

</llo_original>
